<compile_context>
chip_gen: v7x
topology: tpu7x:2x2x1
jax: 0.10.0
libtpu: 0.0.40
codegen_flags: <defaults>
</compile_context>

<pallas_src>
import jax
import jax.numpy as jnp
import numpy as np
from jax.experimental import pallas as pl
from jax.experimental.pallas import tpu as pltpu


def _propogator_kernel(ain_ref, aout_ref, sin_ref, sout_ref, scur_ref,
                       wrz1_ref, wrz2_ref, wrz3_ref, brz_ref,
                       wt1_ref, wt2_ref, wt3_ref, bt_ref,
                       out_ref):
    # ain_ref/aout_ref : (Bt, n_node, NE)
    # sin_ref/sout_ref : (Bt, NE, D)
    # scur_ref         : (Bt, n_node, D)
    # wrz*             : (D, 2D), brz: (1, 2D)
    # wt*              : (D, D),  bt : (1, D)
    bt_blk, n_node, d = scur_ref.shape

    # --- per-batch graph aggregation (tiny matmuls), stacked into one slab ---
    a_in_rows = []
    a_out_rows = []
    for b in range(bt_blk):                       # static unroll over the batch block
        a_in_rows.append(jnp.dot(ain_ref[b], sin_ref[b],
                                 preferred_element_type=jnp.float32))
        a_out_rows.append(jnp.dot(aout_ref[b], sout_ref[b],
                                  preferred_element_type=jnp.float32))
    a_in = jnp.concatenate(a_in_rows, axis=0)     # (Bt*n_node, D)  sublane concat
    a_out = jnp.concatenate(a_out_rows, axis=0)   # (Bt*n_node, D)
    sc = scur_ref[...].reshape(bt_blk * n_node, d)

    # --- fused reset/update gates: one (.., 2D) pre-activation, no lane concat ---
    rz = (jnp.dot(a_in, wrz1_ref[...], preferred_element_type=jnp.float32)
          + jnp.dot(a_out, wrz2_ref[...], preferred_element_type=jnp.float32)
          + jnp.dot(sc, wrz3_ref[...], preferred_element_type=jnp.float32)
          + brz_ref[...])
    rz = jax.nn.sigmoid(rz)                       # (Bt*n_node, 2D)
    r = rz[:, :d]
    z = rz[:, d:]

    # --- candidate state ---
    h_hat = jnp.tanh(
        jnp.dot(a_in, wt1_ref[...], preferred_element_type=jnp.float32)
        + jnp.dot(a_out, wt2_ref[...], preferred_element_type=jnp.float32)
        + jnp.dot(r * sc, wt3_ref[...], preferred_element_type=jnp.float32)
        + bt_ref[...])

    out = (1.0 - z) * sc + z * h_hat              # (Bt*n_node, D)
    out_ref[...] = out.reshape(bt_blk, n_node, d)


def propogator_pallas(state_in, state_out, state_cur, A, params, block_b=None):
    B, n_node, D = state_cur.shape
    ne = state_in.shape[1]            # n_node * n_edge_types
    wr, br, wz, bz, wt, bt = params   # wr/wz/wt: (3D, D), br/bz/bt: (1, D)

    if block_b is None:
        # Amortize per-step overhead while keeping >= 2 grid steps (megacore on v7x).
        block_b = B // 2 if (B >= 2 and B % 2 == 0) else 1
    assert B % block_b == 0, "block_b must divide batch"
    grid = (B // block_b,)

    # --- wrapper-side operand prep (free XLA slices/concats, keeps kernel clean) ---
    A_in = A[:, :, :ne]
    A_out = A[:, :, ne:]

    wrz = jnp.concatenate([wr, wz], axis=1)       # (3D, 2D)
    brz = jnp.concatenate([br, bz], axis=1)       # (1, 2D)
    wrz1, wrz2, wrz3 = wrz[:D], wrz[D:2 * D], wrz[2 * D:]
    wt1, wt2, wt3 = wt[:D], wt[D:2 * D], wt[2 * D:]

    bmap3 = lambda i: (i, 0, 0)
    cmap2 = lambda i: (0, 0)

    # Advisory cost estimate so XLA schedules this small kernel sensibly.
    M = B * n_node
    flops = int(2 * B * n_node * ne * D * 2          # two bmms
                + 2 * M * D * (2 * D) * 3            # fused r/z partial matmuls
                + 2 * M * D * D * 3)                 # transform partial matmuls
    transcendentals = int(M * 3 * D)
    bytes_accessed = int(4 * (A_in.size + A_out.size + state_in.size
                              + state_out.size + state_cur.size
                              + wrz.size + brz.size + wt.size + bt.size
                              + M * D))
    cost = pl.CostEstimate(flops=flops, transcendentals=transcendentals,
                           bytes_accessed=bytes_accessed)

    return pl.pallas_call(
        _propogator_kernel,
        out_shape=jax.ShapeDtypeStruct((B, n_node, D), jnp.float32),
        grid_spec=pltpu.PrefetchScalarGridSpec(
            num_scalar_prefetch=0,
            grid=grid,
            in_specs=[
                pl.BlockSpec((block_b, n_node, ne), bmap3),   # A_in
                pl.BlockSpec((block_b, n_node, ne), bmap3),   # A_out
                pl.BlockSpec((block_b, ne, D), bmap3),        # state_in
                pl.BlockSpec((block_b, ne, D), bmap3),        # state_out
                pl.BlockSpec((block_b, n_node, D), bmap3),    # state_cur
                pl.BlockSpec((D, 2 * D), cmap2),              # Wrz1
                pl.BlockSpec((D, 2 * D), cmap2),              # Wrz2
                pl.BlockSpec((D, 2 * D), cmap2),              # Wrz3
                pl.BlockSpec((1, 2 * D), cmap2),              # brz
                pl.BlockSpec((D, D), cmap2),                  # Wt1
                pl.BlockSpec((D, D), cmap2),                  # Wt2
                pl.BlockSpec((D, D), cmap2),                  # Wt3
                pl.BlockSpec((1, D), cmap2),                  # bt
            ],
            out_specs=pl.BlockSpec((block_b, n_node, D), bmap3),
        ),
        compiler_params=pltpu.CompilerParams(
            dimension_semantics=("parallel",)),
        cost_estimate=cost,
    )(A_in, A_out, state_in, state_out, state_cur,
      wrz1, wrz2, wrz3, brz, wt1, wt2, wt3, bt)


def propogator_ref(state_in, state_out, state_cur, A, params, n_node, n_edge_types):
    """Pure-JAX reference matching the PyTorch semantics."""
    wr, br, wz, bz, wt, bt = params
    ne = n_node * n_edge_types
    A_in = A[:, :, :ne]
    A_out = A[:, :, ne:]
    a_in = jnp.einsum('bnm,bmd->bnd', A_in, state_in)
    a_out = jnp.einsum('bnm,bmd->bnd', A_out, state_out)
    a = jnp.concatenate([a_in, a_out, state_cur], axis=2)
    r = jax.nn.sigmoid(a @ wr + br)
    z = jax.nn.sigmoid(a @ wz + bz)
    joined = jnp.concatenate([a_in, a_out, r * state_cur], axis=2)
    h_hat = jnp.tanh(joined @ wt + bt)
    return (1.0 - z) * state_cur + z * h_hat


if __name__ == "__main__":
    # Small shapes consistent with the module.
    B, state_dim, n_node, n_edge_types = 8, 32, 8, 2
    ne = n_node * n_edge_types

    key = jax.random.PRNGKey(0)
    ks = jax.random.split(key, 10)

    state_in = jax.random.normal(ks[0], (B, ne, state_dim), jnp.float32)
    state_out = jax.random.normal(ks[1], (B, ne, state_dim), jnp.float32)
    state_cur = jax.random.normal(ks[2], (B, n_node, state_dim), jnp.float32)
    A = jax.random.normal(ks[3], (B, n_node, 2 * ne), jnp.float32) * 0.1

    # Deterministic parameter init (nn.Linear(state_dim*3, state_dim) equivalents),
    # stored pre-transposed as (in, out) = (3D, D) for in-kernel x @ W.
    bound = 1.0 / np.sqrt(3 * state_dim)

    def linear_params(kw, kb):
        w = jax.random.uniform(kw, (3 * state_dim, state_dim), jnp.float32, -bound, bound)
        b = jax.random.uniform(kb, (1, state_dim), jnp.float32, -bound, bound)
        return w, b

    wr, br = linear_params(ks[4], ks[5])
    wz, bz = linear_params(ks[6], ks[7])
    wt, bt = linear_params(ks[8], ks[9])
    params = (wr, br, wz, bz, wt, bt)

    out = propogator_pallas(state_in, state_out, state_cur, A, params)
    out = jax.block_until_ready(out)

    ref = propogator_ref(state_in, state_out, state_cur, A, params, n_node, n_edge_types)
    np.testing.assert_allclose(np.asarray(out), np.asarray(ref), rtol=1e-5, atol=1e-5)

    print("KERNEL_OK")
</pallas_src>

<mosaic_0001>
module attributes {stable_mosaic.version = 11 : i64} {
  func.func @_propogator_kernel(%arg0: i32, %arg1: memref<4x8x16xf32, #tpu.memory_space<vmem>>, %arg2: memref<4x8x16xf32, #tpu.memory_space<vmem>>, %arg3: memref<4x16x32xf32, #tpu.memory_space<vmem>>, %arg4: memref<4x16x32xf32, #tpu.memory_space<vmem>>, %arg5: memref<4x8x32xf32, #tpu.memory_space<vmem>>, %arg6: memref<32x64xf32, #tpu.memory_space<vmem>>, %arg7: memref<32x64xf32, #tpu.memory_space<vmem>>, %arg8: memref<32x64xf32, #tpu.memory_space<vmem>>, %arg9: memref<1x64xf32, #tpu.memory_space<vmem>>, %arg10: memref<32x32xf32, #tpu.memory_space<vmem>>, %arg11: memref<32x32xf32, #tpu.memory_space<vmem>>, %arg12: memref<32x32xf32, #tpu.memory_space<vmem>>, %arg13: memref<1x32xf32, #tpu.memory_space<vmem>>, %arg14: memref<4x8x32xf32, #tpu.memory_space<vmem>>) attributes {dimension_semantics = [#tpu.dimension_semantics<parallel>], iteration_bounds = array<i64: 2>, scalar_prefetch = 0 : i64, scratch_operands = 0 : i64, tpu.core_type = #tpu.core_type<tc>, window_params = [{transform_indices = @transform_0, window_bounds = array<i64: 4, 8, 16>}, {transform_indices = @transform_1, window_bounds = array<i64: 4, 8, 16>}, {transform_indices = @transform_2, window_bounds = array<i64: 4, 16, 32>}, {transform_indices = @transform_3, window_bounds = array<i64: 4, 16, 32>}, {transform_indices = @transform_4, window_bounds = array<i64: 4, 8, 32>}, {pipeline_mode = #tpu.pipeline_mode<synchronous>, transform_indices = @transform_5, window_bounds = array<i64: 32, 64>}, {pipeline_mode = #tpu.pipeline_mode<synchronous>, transform_indices = @transform_6, window_bounds = array<i64: 32, 64>}, {pipeline_mode = #tpu.pipeline_mode<synchronous>, transform_indices = @transform_7, window_bounds = array<i64: 32, 64>}, {pipeline_mode = #tpu.pipeline_mode<synchronous>, transform_indices = @transform_8, window_bounds = array<i64: 1, 64>}, {pipeline_mode = #tpu.pipeline_mode<synchronous>, transform_indices = @transform_9, window_bounds = array<i64: 32, 32>}, {pipeline_mode = #tpu.pipeline_mode<synchronous>, transform_indices = @transform_10, window_bounds = array<i64: 32, 32>}, {pipeline_mode = #tpu.pipeline_mode<synchronous>, transform_indices = @transform_11, window_bounds = array<i64: 32, 32>}, {pipeline_mode = #tpu.pipeline_mode<synchronous>, transform_indices = @transform_12, window_bounds = array<i64: 1, 32>}, {transform_indices = @transform_13, window_bounds = array<i64: 4, 8, 32>}]} {
    %c0 = arith.constant 0 : index
    %c0_0 = arith.constant 0 : index
    %c0_1 = arith.constant 0 : index
    %0 = vector.load %arg1[%c0, %c0_0, %c0_1] : memref<4x8x16xf32, #tpu.memory_space<vmem>>, vector<1x8x16xf32>
    %1 = vector.shape_cast %0 : vector<1x8x16xf32> to vector<8x16xf32>
    %c0_2 = arith.constant 0 : index
    %c0_3 = arith.constant 0 : index
    %c0_4 = arith.constant 0 : index
    %2 = vector.load %arg3[%c0_2, %c0_3, %c0_4] : memref<4x16x32xf32, #tpu.memory_space<vmem>>, vector<1x16x32xf32>
    %3 = vector.shape_cast %2 : vector<1x16x32xf32> to vector<16x32xf32>
    %cst = arith.constant dense<0.000000e+00> : vector<8x32xf32>
    %4 = tpu.matmul %1, %3, %cst {dimension_numbers = #tpu.dot_dimension_numbers<[1], [0], [0], [1], [0, 0, 1, 1], [], []>} : vector<8x16xf32>, vector<16x32xf32>, vector<8x32xf32> -> vector<8x32xf32>
    %c0_5 = arith.constant 0 : index
    %c0_6 = arith.constant 0 : index
    %c0_7 = arith.constant 0 : index
    %5 = vector.load %arg2[%c0_5, %c0_6, %c0_7] : memref<4x8x16xf32, #tpu.memory_space<vmem>>, vector<1x8x16xf32>
    %6 = vector.shape_cast %5 : vector<1x8x16xf32> to vector<8x16xf32>
    %c0_8 = arith.constant 0 : index
    %c0_9 = arith.constant 0 : index
    %c0_10 = arith.constant 0 : index
    %7 = vector.load %arg4[%c0_8, %c0_9, %c0_10] : memref<4x16x32xf32, #tpu.memory_space<vmem>>, vector<1x16x32xf32>
    %8 = vector.shape_cast %7 : vector<1x16x32xf32> to vector<16x32xf32>
    %cst_11 = arith.constant dense<0.000000e+00> : vector<8x32xf32>
    %9 = tpu.matmul %6, %8, %cst_11 {dimension_numbers = #tpu.dot_dimension_numbers<[1], [0], [0], [1], [0, 0, 1, 1], [], []>} : vector<8x16xf32>, vector<16x32xf32>, vector<8x32xf32> -> vector<8x32xf32>
    %c1 = arith.constant 1 : index
    %c0_12 = arith.constant 0 : index
    %c0_13 = arith.constant 0 : index
    %10 = vector.load %arg1[%c1, %c0_12, %c0_13] : memref<4x8x16xf32, #tpu.memory_space<vmem>>, vector<1x8x16xf32>
    %11 = vector.shape_cast %10 : vector<1x8x16xf32> to vector<8x16xf32>
    %c1_14 = arith.constant 1 : index
    %c0_15 = arith.constant 0 : index
    %c0_16 = arith.constant 0 : index
    %12 = vector.load %arg3[%c1_14, %c0_15, %c0_16] : memref<4x16x32xf32, #tpu.memory_space<vmem>>, vector<1x16x32xf32>
    %13 = vector.shape_cast %12 : vector<1x16x32xf32> to vector<16x32xf32>
    %cst_17 = arith.constant dense<0.000000e+00> : vector<8x32xf32>
    %14 = tpu.matmul %11, %13, %cst_17 {dimension_numbers = #tpu.dot_dimension_numbers<[1], [0], [0], [1], [0, 0, 1, 1], [], []>} : vector<8x16xf32>, vector<16x32xf32>, vector<8x32xf32> -> vector<8x32xf32>
    %c1_18 = arith.constant 1 : index
    %c0_19 = arith.constant 0 : index
    %c0_20 = arith.constant 0 : index
    %15 = vector.load %arg2[%c1_18, %c0_19, %c0_20] : memref<4x8x16xf32, #tpu.memory_space<vmem>>, vector<1x8x16xf32>
    %16 = vector.shape_cast %15 : vector<1x8x16xf32> to vector<8x16xf32>
    %c1_21 = arith.constant 1 : index
    %c0_22 = arith.constant 0 : index
    %c0_23 = arith.constant 0 : index
    %17 = vector.load %arg4[%c1_21, %c0_22, %c0_23] : memref<4x16x32xf32, #tpu.memory_space<vmem>>, vector<1x16x32xf32>
    %18 = vector.shape_cast %17 : vector<1x16x32xf32> to vector<16x32xf32>
    %cst_24 = arith.constant dense<0.000000e+00> : vector<8x32xf32>
    %19 = tpu.matmul %16, %18, %cst_24 {dimension_numbers = #tpu.dot_dimension_numbers<[1], [0], [0], [1], [0, 0, 1, 1], [], []>} : vector<8x16xf32>, vector<16x32xf32>, vector<8x32xf32> -> vector<8x32xf32>
    %c2 = arith.constant 2 : index
    %c0_25 = arith.constant 0 : index
    %c0_26 = arith.constant 0 : index
    %20 = vector.load %arg1[%c2, %c0_25, %c0_26] : memref<4x8x16xf32, #tpu.memory_space<vmem>>, vector<1x8x16xf32>
    %21 = vector.shape_cast %20 : vector<1x8x16xf32> to vector<8x16xf32>
    %c2_27 = arith.constant 2 : index
    %c0_28 = arith.constant 0 : index
    %c0_29 = arith.constant 0 : index
    %22 = vector.load %arg3[%c2_27, %c0_28, %c0_29] : memref<4x16x32xf32, #tpu.memory_space<vmem>>, vector<1x16x32xf32>
    %23 = vector.shape_cast %22 : vector<1x16x32xf32> to vector<16x32xf32>
    %cst_30 = arith.constant dense<0.000000e+00> : vector<8x32xf32>
    %24 = tpu.matmul %21, %23, %cst_30 {dimension_numbers = #tpu.dot_dimension_numbers<[1], [0], [0], [1], [0, 0, 1, 1], [], []>} : vector<8x16xf32>, vector<16x32xf32>, vector<8x32xf32> -> vector<8x32xf32>
    %c2_31 = arith.constant 2 : index
    %c0_32 = arith.constant 0 : index
    %c0_33 = arith.constant 0 : index
    %25 = vector.load %arg2[%c2_31, %c0_32, %c0_33] : memref<4x8x16xf32, #tpu.memory_space<vmem>>, vector<1x8x16xf32>
    %26 = vector.shape_cast %25 : vector<1x8x16xf32> to vector<8x16xf32>
    %c2_34 = arith.constant 2 : index
    %c0_35 = arith.constant 0 : index
    %c0_36 = arith.constant 0 : index
    %27 = vector.load %arg4[%c2_34, %c0_35, %c0_36] : memref<4x16x32xf32, #tpu.memory_space<vmem>>, vector<1x16x32xf32>
    %28 = vector.shape_cast %27 : vector<1x16x32xf32> to vector<16x32xf32>
    %cst_37 = arith.constant dense<0.000000e+00> : vector<8x32xf32>
    %29 = tpu.matmul %26, %28, %cst_37 {dimension_numbers = #tpu.dot_dimension_numbers<[1], [0], [0], [1], [0, 0, 1, 1], [], []>} : vector<8x16xf32>, vector<16x32xf32>, vector<8x32xf32> -> vector<8x32xf32>
    %c3 = arith.constant 3 : index
    %c0_38 = arith.constant 0 : index
    %c0_39 = arith.constant 0 : index
    %30 = vector.load %arg1[%c3, %c0_38, %c0_39] : memref<4x8x16xf32, #tpu.memory_space<vmem>>, vector<1x8x16xf32>
    %31 = vector.shape_cast %30 : vector<1x8x16xf32> to vector<8x16xf32>
    %c3_40 = arith.constant 3 : index
    %c0_41 = arith.constant 0 : index
    %c0_42 = arith.constant 0 : index
    %32 = vector.load %arg3[%c3_40, %c0_41, %c0_42] : memref<4x16x32xf32, #tpu.memory_space<vmem>>, vector<1x16x32xf32>
    %33 = vector.shape_cast %32 : vector<1x16x32xf32> to vector<16x32xf32>
    %cst_43 = arith.constant dense<0.000000e+00> : vector<8x32xf32>
    %34 = tpu.matmul %31, %33, %cst_43 {dimension_numbers = #tpu.dot_dimension_numbers<[1], [0], [0], [1], [0, 0, 1, 1], [], []>} : vector<8x16xf32>, vector<16x32xf32>, vector<8x32xf32> -> vector<8x32xf32>
    %c3_44 = arith.constant 3 : index
    %c0_45 = arith.constant 0 : index
    %c0_46 = arith.constant 0 : index
    %35 = vector.load %arg2[%c3_44, %c0_45, %c0_46] : memref<4x8x16xf32, #tpu.memory_space<vmem>>, vector<1x8x16xf32>
    %36 = vector.shape_cast %35 : vector<1x8x16xf32> to vector<8x16xf32>
    %c3_47 = arith.constant 3 : index
    %c0_48 = arith.constant 0 : index
    %c0_49 = arith.constant 0 : index
    %37 = vector.load %arg4[%c3_47, %c0_48, %c0_49] : memref<4x16x32xf32, #tpu.memory_space<vmem>>, vector<1x16x32xf32>
    %38 = vector.shape_cast %37 : vector<1x16x32xf32> to vector<16x32xf32>
    %cst_50 = arith.constant dense<0.000000e+00> : vector<8x32xf32>
    %39 = tpu.matmul %36, %38, %cst_50 {dimension_numbers = #tpu.dot_dimension_numbers<[1], [0], [0], [1], [0, 0, 1, 1], [], []>} : vector<8x16xf32>, vector<16x32xf32>, vector<8x32xf32> -> vector<8x32xf32>
    %40 = tpu.concatenate %4, %14, %24, %34 in 0 : vector<8x32xf32>, vector<8x32xf32>, vector<8x32xf32>, vector<8x32xf32> -> vector<32x32xf32>
    %41 = tpu.concatenate %9, %19, %29, %39 in 0 : vector<8x32xf32>, vector<8x32xf32>, vector<8x32xf32>, vector<8x32xf32> -> vector<32x32xf32>
    %c0_51 = arith.constant 0 : index
    %c0_52 = arith.constant 0 : index
    %c0_53 = arith.constant 0 : index
    %42 = vector.load %arg5[%c0_51, %c0_52, %c0_53] : memref<4x8x32xf32, #tpu.memory_space<vmem>>, vector<4x8x32xf32>
    %43 = vector.shape_cast %42 : vector<4x8x32xf32> to vector<32x32xf32>
    %c0_54 = arith.constant 0 : index
    %c0_55 = arith.constant 0 : index
    %44 = vector.load %arg6[%c0_54, %c0_55] : memref<32x64xf32, #tpu.memory_space<vmem>>, vector<32x64xf32>
    %cst_56 = arith.constant dense<0.000000e+00> : vector<32x64xf32>
    %45 = tpu.matmul %40, %44, %cst_56 {dimension_numbers = #tpu.dot_dimension_numbers<[1], [0], [0], [1], [0, 0, 1, 1], [], []>} : vector<32x32xf32>, vector<32x64xf32>, vector<32x64xf32> -> vector<32x64xf32>
    %c0_57 = arith.constant 0 : index
    %c0_58 = arith.constant 0 : index
    %46 = vector.load %arg7[%c0_57, %c0_58] : memref<32x64xf32, #tpu.memory_space<vmem>>, vector<32x64xf32>
    %cst_59 = arith.constant dense<0.000000e+00> : vector<32x64xf32>
    %47 = tpu.matmul %41, %46, %cst_59 {dimension_numbers = #tpu.dot_dimension_numbers<[1], [0], [0], [1], [0, 0, 1, 1], [], []>} : vector<32x32xf32>, vector<32x64xf32>, vector<32x64xf32> -> vector<32x64xf32>
    %48 = arith.addf %45, %47 : vector<32x64xf32>
    %c0_60 = arith.constant 0 : index
    %c0_61 = arith.constant 0 : index
    %49 = vector.load %arg8[%c0_60, %c0_61] : memref<32x64xf32, #tpu.memory_space<vmem>>, vector<32x64xf32>
    %cst_62 = arith.constant dense<0.000000e+00> : vector<32x64xf32>
    %50 = tpu.matmul %43, %49, %cst_62 {dimension_numbers = #tpu.dot_dimension_numbers<[1], [0], [0], [1], [0, 0, 1, 1], [], []>} : vector<32x32xf32>, vector<32x64xf32>, vector<32x64xf32> -> vector<32x64xf32>
    %51 = arith.addf %48, %50 : vector<32x64xf32>
    %c0_63 = arith.constant 0 : index
    %c0_64 = arith.constant 0 : index
    %52 = vector.load %arg9[%c0_63, %c0_64] : memref<1x64xf32, #tpu.memory_space<vmem>>, vector<1x64xf32>
    %53 = vector.broadcast %52 : vector<1x64xf32> to vector<32x64xf32>
    %54 = arith.addf %51, %53 : vector<32x64xf32>
    %55 = arith.negf %54 : vector<32x64xf32>
    %56 = math.exp %55 : vector<32x64xf32>
    %cst_65 = arith.constant 1.000000e+00 : f32
    %57 = vector.broadcast %cst_65 : f32 to vector<32x64xf32>
    %58 = arith.addf %57, %56 : vector<32x64xf32>
    %59 = arith.divf %57, %58 : vector<32x64xf32>
    %60 = vector.extract_strided_slice %59 {offsets = [0, 0], sizes = [32, 32], strides = [1, 1]} : vector<32x64xf32> to vector<32x32xf32>
    %61 = vector.extract_strided_slice %59 {offsets = [0, 32], sizes = [32, 32], strides = [1, 1]} : vector<32x64xf32> to vector<32x32xf32>
    %c0_66 = arith.constant 0 : index
    %c0_67 = arith.constant 0 : index
    %62 = vector.load %arg10[%c0_66, %c0_67] : memref<32x32xf32, #tpu.memory_space<vmem>>, vector<32x32xf32>
    %cst_68 = arith.constant dense<0.000000e+00> : vector<32x32xf32>
    %63 = tpu.matmul %40, %62, %cst_68 {dimension_numbers = #tpu.dot_dimension_numbers<[1], [0], [0], [1], [0, 0, 1, 1], [], []>} : vector<32x32xf32>, vector<32x32xf32>, vector<32x32xf32> -> vector<32x32xf32>
    %c0_69 = arith.constant 0 : index
    %c0_70 = arith.constant 0 : index
    %64 = vector.load %arg11[%c0_69, %c0_70] : memref<32x32xf32, #tpu.memory_space<vmem>>, vector<32x32xf32>
    %cst_71 = arith.constant dense<0.000000e+00> : vector<32x32xf32>
    %65 = tpu.matmul %41, %64, %cst_71 {dimension_numbers = #tpu.dot_dimension_numbers<[1], [0], [0], [1], [0, 0, 1, 1], [], []>} : vector<32x32xf32>, vector<32x32xf32>, vector<32x32xf32> -> vector<32x32xf32>
    %66 = arith.addf %63, %65 : vector<32x32xf32>
    %67 = arith.mulf %60, %43 : vector<32x32xf32>
    %c0_72 = arith.constant 0 : index
    %c0_73 = arith.constant 0 : index
    %68 = vector.load %arg12[%c0_72, %c0_73] : memref<32x32xf32, #tpu.memory_space<vmem>>, vector<32x32xf32>
    %cst_74 = arith.constant dense<0.000000e+00> : vector<32x32xf32>
    %69 = tpu.matmul %67, %68, %cst_74 {dimension_numbers = #tpu.dot_dimension_numbers<[1], [0], [0], [1], [0, 0, 1, 1], [], []>} : vector<32x32xf32>, vector<32x32xf32>, vector<32x32xf32> -> vector<32x32xf32>
    %70 = arith.addf %66, %69 : vector<32x32xf32>
    %c0_75 = arith.constant 0 : index
    %c0_76 = arith.constant 0 : index
    %71 = vector.load %arg13[%c0_75, %c0_76] : memref<1x32xf32, #tpu.memory_space<vmem>>, vector<1x32xf32>
    %72 = vector.broadcast %71 : vector<1x32xf32> to vector<32x32xf32>
    %73 = arith.addf %70, %72 : vector<32x32xf32>
    %74 = math.tanh %73 : vector<32x32xf32>
    %cst_77 = arith.constant 1.000000e+00 : f32
    %75 = vector.broadcast %cst_77 : f32 to vector<32x32xf32>
    %76 = arith.subf %75, %61 : vector<32x32xf32>
    %77 = arith.mulf %76, %43 : vector<32x32xf32>
    %78 = arith.mulf %61, %74 : vector<32x32xf32>
    %79 = arith.addf %77, %78 : vector<32x32xf32>
    %80 = vector.shape_cast %79 : vector<32x32xf32> to vector<4x8x32xf32>
    %c0_78 = arith.constant 0 : index
    %c0_79 = arith.constant 0 : index
    %c0_80 = arith.constant 0 : index
    %81 = vector.load %arg14[%c0_78, %c0_79, %c0_80] : memref<4x8x32xf32, #tpu.memory_space<vmem>>, vector<4x8x32xf32>
    tpu.vector_store %arg14[%c0_78, %c0_79, %c0_80], %80 {strides = array<i32>} : memref<4x8x32xf32, #tpu.memory_space<vmem>>, vector<4x8x32xf32>,
    return
  }
  func.func @transform_0(%arg0: i32) -> (i32, i32, i32) {
    %c0_i32 = arith.constant 0 : i32
    %c0_i32_0 = arith.constant 0 : i32
    %c0_i32_1 = arith.constant 0 : i32
    return %arg0, %c0_i32, %c0_i32_0 : i32, i32, i32
  }
  func.func @transform_1(%arg0: i32) -> (i32, i32, i32) {
    %c0_i32 = arith.constant 0 : i32
    %c0_i32_0 = arith.constant 0 : i32
    %c0_i32_1 = arith.constant 0 : i32
    return %arg0, %c0_i32, %c0_i32_0 : i32, i32, i32
  }
  func.func @transform_2(%arg0: i32) -> (i32, i32, i32) {
    %c0_i32 = arith.constant 0 : i32
    %c0_i32_0 = arith.constant 0 : i32
    %c0_i32_1 = arith.constant 0 : i32
    return %arg0, %c0_i32, %c0_i32_0 : i32, i32, i32
  }
  func.func @transform_3(%arg0: i32) -> (i32, i32, i32) {
    %c0_i32 = arith.constant 0 : i32
    %c0_i32_0 = arith.constant 0 : i32
    %c0_i32_1 = arith.constant 0 : i32
    return %arg0, %c0_i32, %c0_i32_0 : i32, i32, i32
  }
  func.func @transform_4(%arg0: i32) -> (i32, i32, i32) {
    %c0_i32 = arith.constant 0 : i32
    %c0_i32_0 = arith.constant 0 : i32
    %c0_i32_1 = arith.constant 0 : i32
    return %arg0, %c0_i32, %c0_i32_0 : i32, i32, i32
  }
  func.func @transform_5(%arg0: i32) -> (i32, i32) {
    %c0_i32 = arith.constant 0 : i32
    %c0_i32_0 = arith.constant 0 : i32
    %c0_i32_1 = arith.constant 0 : i32
    return %c0_i32, %c0_i32_0 : i32, i32
  }
  func.func @transform_6(%arg0: i32) -> (i32, i32) {
    %c0_i32 = arith.constant 0 : i32
    %c0_i32_0 = arith.constant 0 : i32
    %c0_i32_1 = arith.constant 0 : i32
    return %c0_i32, %c0_i32_0 : i32, i32
  }
  func.func @transform_7(%arg0: i32) -> (i32, i32) {
    %c0_i32 = arith.constant 0 : i32
    %c0_i32_0 = arith.constant 0 : i32
    %c0_i32_1 = arith.constant 0 : i32
    return %c0_i32, %c0_i32_0 : i32, i32
  }
  func.func @transform_8(%arg0: i32) -> (i32, i32) {
    %c0_i32 = arith.constant 0 : i32
    %c0_i32_0 = arith.constant 0 : i32
    %c0_i32_1 = arith.constant 0 : i32
    return %c0_i32, %c0_i32_0 : i32, i32
  }
  func.func @transform_9(%arg0: i32) -> (i32, i32) {
    %c0_i32 = arith.constant 0 : i32
    %c0_i32_0 = arith.constant 0 : i32
    %c0_i32_1 = arith.constant 0 : i32
    return %c0_i32, %c0_i32_0 : i32, i32
  }
  func.func @transform_10(%arg0: i32) -> (i32, i32) {
    %c0_i32 = arith.constant 0 : i32
    %c0_i32_0 = arith.constant 0 : i32
    %c0_i32_1 = arith.constant 0 : i32
    return %c0_i32, %c0_i32_0 : i32, i32
  }
  func.func @transform_11(%arg0: i32) -> (i32, i32) {
    %c0_i32 = arith.constant 0 : i32
    %c0_i32_0 = arith.constant 0 : i32
    %c0_i32_1 = arith.constant 0 : i32
    return %c0_i32, %c0_i32_0 : i32, i32
  }
  func.func @transform_12(%arg0: i32) -> (i32, i32) {
    %c0_i32 = arith.constant 0 : i32
    %c0_i32_0 = arith.constant 0 : i32
    %c0_i32_1 = arith.constant 0 : i32
    return %c0_i32, %c0_i32_0 : i32, i32
  }
  func.func @transform_13(%arg0: i32) -> (i32, i32, i32) {
    %c0_i32 = arith.constant 0 : i32
    %c0_i32_0 = arith.constant 0 : i32
    %c0_i32_1 = arith.constant 0 : i32
    return %arg0, %c0_i32, %c0_i32_0 : i32, i32, i32
  }
}

</mosaic_0001>

<llo_original>
// kernel: tpu_custom_call.1
$region0: #{tpu_custom_call.1}
  #allocation0 [shape = 'u32[]', space=smem, size = 0x4, offset = 0x4, fixed_abs, tag = 'smem constant byte address 0x4 - core index']
  #allocation1 [shape = 'u32[144,128]{1,0:T(1,128)}', space=vmem, size = 0x12000, scoped, tag = 'internal scratch']
  %s0 = inlined_call_operand.hbm [shape: f32[8,8,16], index: 0, kind: input, shape index: {}]
  %s1 = inlined_call_operand.hbm [shape: f32[8,8,16], index: 1, kind: input, shape index: {}]
  %s2 = inlined_call_operand.hbm [shape: f32[8,16,32], index: 2, kind: input, shape index: {}]
  %s3 = inlined_call_operand.hbm [shape: f32[8,16,32], index: 3, kind: input, shape index: {}]
  %s4 = inlined_call_operand.hbm [shape: f32[8,8,32], index: 4, kind: input, shape index: {}]
  %s5 = inlined_call_operand.hbm [shape: f32[32,64], index: 5, kind: input, shape index: {}]
  %s6 = inlined_call_operand.hbm [shape: f32[32,64], index: 6, kind: input, shape index: {}]
  %s7 = inlined_call_operand.hbm [shape: f32[32,64], index: 7, kind: input, shape index: {}]
  %s8 = inlined_call_operand.vmem [shape: f32[1,64], index: 8, kind: input, shape index: {}]
  %s9 = inlined_call_operand.vmem [shape: f32[32,32], index: 9, kind: input, shape index: {}]
  %s10 = inlined_call_operand.hbm [shape: f32[32,32], index: 10, kind: input, shape index: {}]
  %s11 = inlined_call_operand.hbm [shape: f32[32,32], index: 11, kind: input, shape index: {}]
  %s12 = inlined_call_operand.vmem [shape: f32[1,32], index: 12, kind: input, shape index: {}]
  %s13 = inlined_call_operand.hbm [shape: f32[8,8,32], index: 13, kind: output, shape index: {}]
  %s14 = sld [smem:[#allocation0]]
  $region125: #{tpu_custom_call.1} parent=0
    _
  %s16 = ssub.s32 1, %s14
  %s17 = scalar_select 0, %s16, %s14
  $region1: #{tpu_custom_call.1} parent=0
    #allocation2 [shape = 'u8[32768]{0}', space=vmem, size = 0x8000, scoped, tag = 'input window, operand 0']
    #allocation3 [shape = 's32[2]{0}', space=sflag, size = 0x8, scoped, tag = 'scoped memory for tpu_custom_call.1']
    #allocation4 [shape = 's32[2]{0}', space=sflag, size = 0x8, scoped, tag = 'scoped memory for tpu_custom_call.1']
    #allocation5 [shape = 'u8[32768]{0}', space=vmem, size = 0x8000, scoped, tag = 'input window, operand 1']
    #allocation6 [shape = 's32[2]{0}', space=sflag, size = 0x8, scoped, tag = 'scoped memory for tpu_custom_call.1']
    #allocation7 [shape = 'u8[65536]{0}', space=vmem, size = 0x10000, scoped, tag = 'input window, operand 2']
    #allocation8 [shape = 'u8[65536]{0}', space=vmem, size = 0x10000, scoped, tag = 'input window, operand 3']
    #allocation9 [shape = 's32[2]{0}', space=sflag, size = 0x8, scoped, tag = 'scoped memory for tpu_custom_call.1']
    #allocation10 [shape = 'u8[32768]{0}', space=vmem, size = 0x8000, scoped, tag = 'input window, operand 4']
    #allocation11 [shape = 'u8[16384]{0}', space=vmem, size = 0x4000, scoped, tag = 'input window, operand 5, single buffered']
    #allocation12 [shape = 's32[1]{0}', space=sflag, size = 0x4, scoped, tag = 'scoped memory for tpu_custom_call.1']
    #allocation13 [shape = 'u8[16384]{0}', space=vmem, size = 0x4000, scoped, tag = 'input window, operand 6, single buffered']
    #allocation14 [shape = 'u8[16384]{0}', space=vmem, size = 0x4000, scoped, tag = 'input window, operand 7, single buffered']
    #allocation15 [shape = 's32[1]{0}', space=sflag, size = 0x4, scoped, tag = 'scoped memory for tpu_custom_call.1']
    #allocation16 [shape = 'u8[16384]{0}', space=vmem, size = 0x4000, scoped, tag = 'input window, operand 10, single buffered']
    #allocation17 [shape = 'u8[16384]{0}', space=vmem, size = 0x4000, scoped, tag = 'input window, operand 11, single buffered']
    #allocation18 [shape = 's32[1]{0}', space=sflag, size = 0x4, scoped, tag = 'scoped memory for tpu_custom_call.1']
    #allocation19 [shape = 'u8[32768]{0}', space=vmem, size = 0x8000, scoped, tag = 'output window, operand 0']
    %18 = vsyncpa [#allocation3], 0
    %s19 = scalar_lea.sflag [#allocation3], 1
    %20 = vsyncpa %s19, 0
    %21 = vsyncpa [#allocation6], 0
    %s22 = scalar_lea.sflag [#allocation6], 1
    %23 = vsyncpa %s22, 0
    %24 = vsyncpa [#allocation9], 0
    %s25 = scalar_lea.sflag [#allocation9], 1
    %26 = vsyncpa %s25, 0
    %27 = vsyncpa [#allocation12], 0
    %28 = vsyncpa [#allocation15], 0
    %29 = vsyncpa [#allocation18], 0
    %30 = vsyncpa [#allocation4], 0
    %s31 = scalar_lea.sflag [#allocation4], 1
    %32 = vsyncpa %s31, 0
    loop: start=0, step=1, limit=4
    $region2: #{tpu_custom_call.1} parent=1 // loop_pre_header
      _
    $region3: #{tpu_custom_call.1} parent=1 // loop_header
      %s34 = sphi 0, %s38
      %p35 = scmp.ge.s32.totalorder %s34, 4
      %s44 = sphi 0, %s46
      %s47 = sphi 0, %s44
      %s48 = sphi 0, %s47
      %s64 = sphi 0, %s48
      %s70 = sphi 0, %s72
      %s73 = sphi 0, %s70
      %s74 = sphi 0, %s73
      %s90 = sphi 0, %s74
      %s96 = sphi 0, %s98
      %s99 = sphi 0, %s96
      %s100 = sphi 0, %s99
      %s116 = sphi 0, %s100
      %s122 = sphi 0, %s124
      %s125 = sphi 0, %s122
      %s126 = sphi 0, %s125
      %s142 = sphi 0, %s126
      %s148 = sphi 0, %s150
      %s151 = sphi 0, %s148
      %s152 = sphi 0, %s151
      %s168 = sphi 0, %s152
      %s172 = sphi 0, %s172
      %s174 = sphi 0, %s172
      %s175 = sphi 0, %s174
      %s189 = sphi 0, %s175
      %s193 = sphi 0, %s193
      %s195 = sphi 0, %s193
      %s196 = sphi 0, %s195
      %s210 = sphi 0, %s196
      %s214 = sphi 0, %s214
      %s216 = sphi 0, %s214
      %s217 = sphi 0, %s216
      %s231 = sphi 0, %s217
      %s235 = sphi 0, %s235
      %s237 = sphi 0, %s235
      %s238 = sphi 0, %s237
      %s252 = sphi 0, %s238
      %s256 = sphi 0, %s256
      %s258 = sphi 0, %s256
      %s259 = sphi 0, %s258
      %s273 = sphi 0, %s259
      %s277 = sphi 0, %s277
      %s279 = sphi 0, %s277
      %s280 = sphi 0, %s279
      %s294 = sphi 0, %s280
      %s298 = sphi 0, %s298
      %s300 = sphi 0, %s298
      %s301 = sphi 0, %s300
      %s315 = sphi 0, %s301
      %s319 = sphi 0, %s319
      %s321 = sphi 0, %s319
      %s322 = sphi 0, %s321
      %s336 = sphi 0, %s322
      %s342 = sphi 0, %s344
      %s345 = sphi 0, %s342
      %s346 = sphi 0, %s345
      %s362 = sphi 0, %s346
    $region4: #{tpu_custom_call.1} parent=1 // loop_header_branch
      %37 = sbr.rel (%p35) target = $region8
    $region5: #{tpu_custom_call.1} parent=1 // loop_body
      %s39 = ssub.s32 %s34, 1
      %s40 = ssub.s32 %s34, 2
      %s41 = sadd.s32 %s34, 1
      %s42 = ssub.s32 %s34, %s41
      %p43 = scmp.eq.s32.totalorder %s42, 0
      %s45 = sadd.s32 %s44, 1
      %s46 = scalar_select %p43, %s44, %s45
      %p49 = pneg %p43
      %p50 = scmp.eq.s32.totalorder %s34, 1
      %p51 = por %p49, %p50
      %p52 = scmp.ne.s32.totalorder %s44, %s47
      %p53 = scmp.eq.s32.totalorder %s34, 0
      %p54 = por %p52, %p53
      %p55 = scmp.ne.s32.totalorder %s44, %s47
      %p56 = scmp.eq.s32.totalorder %s39, 1
      %p57 = por %p55, %p56
      %p58 = scmp.ne.s32.totalorder %s47, %s48
      %p59 = scmp.eq.s32.totalorder %s39, 0
      %p60 = por %p58, %p59
      %p61 = scmp.ne.s32.totalorder %s47, %s48
      %p62 = scmp.eq.s32.totalorder %s40, 1
      %p63 = por %p61, %p62
      %p65 = scmp.ne.s32.totalorder %s48, %s64
      %p66 = scmp.eq.s32.totalorder %s40, 0
      %p67 = por %p65, %p66
      %s68 = ssub.s32 %s34, %s41
      %p69 = scmp.eq.s32.totalorder %s68, 0
      %s71 = sadd.s32 %s70, 1
      %s72 = scalar_select %p69, %s70, %s71
      %p75 = pneg %p69
      %p76 = scmp.eq.s32.totalorder %s34, 1
      %p77 = por %p75, %p76
      %p78 = scmp.ne.s32.totalorder %s70, %s73
      %p79 = scmp.eq.s32.totalorder %s34, 0
      %p80 = por %p78, %p79
      %p81 = scmp.ne.s32.totalorder %s70, %s73
      %p82 = scmp.eq.s32.totalorder %s39, 1
      %p83 = por %p81, %p82
      %p84 = scmp.ne.s32.totalorder %s73, %s74
      %p85 = scmp.eq.s32.totalorder %s39, 0
      %p86 = por %p84, %p85
      %p87 = scmp.ne.s32.totalorder %s73, %s74
      %p88 = scmp.eq.s32.totalorder %s40, 1
      %p89 = por %p87, %p88
      %p91 = scmp.ne.s32.totalorder %s74, %s90
      %p92 = scmp.eq.s32.totalorder %s40, 0
      %p93 = por %p91, %p92
      %s94 = ssub.s32 %s34, %s41
      %p95 = scmp.eq.s32.totalorder %s94, 0
      %s97 = sadd.s32 %s96, 1
      %s98 = scalar_select %p95, %s96, %s97
      %p101 = pneg %p95
      %p102 = scmp.eq.s32.totalorder %s34, 1
      %p103 = por %p101, %p102
      %p104 = scmp.ne.s32.totalorder %s96, %s99
      %p105 = scmp.eq.s32.totalorder %s34, 0
      %p106 = por %p104, %p105
      %p107 = scmp.ne.s32.totalorder %s96, %s99
      %p108 = scmp.eq.s32.totalorder %s39, 1
      %p109 = por %p107, %p108
      %p110 = scmp.ne.s32.totalorder %s99, %s100
      %p111 = scmp.eq.s32.totalorder %s39, 0
      %p112 = por %p110, %p111
      %p113 = scmp.ne.s32.totalorder %s99, %s100
      %p114 = scmp.eq.s32.totalorder %s40, 1
      %p115 = por %p113, %p114
      %p117 = scmp.ne.s32.totalorder %s100, %s116
      %p118 = scmp.eq.s32.totalorder %s40, 0
      %p119 = por %p117, %p118
      %s120 = ssub.s32 %s34, %s41
      %p121 = scmp.eq.s32.totalorder %s120, 0
      %s123 = sadd.s32 %s122, 1
      %s124 = scalar_select %p121, %s122, %s123
      %p127 = pneg %p121
      %p128 = scmp.eq.s32.totalorder %s34, 1
      %p129 = por %p127, %p128
      %p130 = scmp.ne.s32.totalorder %s122, %s125
      %p131 = scmp.eq.s32.totalorder %s34, 0
      %p132 = por %p130, %p131
      %p133 = scmp.ne.s32.totalorder %s122, %s125
      %p134 = scmp.eq.s32.totalorder %s39, 1
      %p135 = por %p133, %p134
      %p136 = scmp.ne.s32.totalorder %s125, %s126
      %p137 = scmp.eq.s32.totalorder %s39, 0
      %p138 = por %p136, %p137
      %p139 = scmp.ne.s32.totalorder %s125, %s126
      %p140 = scmp.eq.s32.totalorder %s40, 1
      %p141 = por %p139, %p140
      %p143 = scmp.ne.s32.totalorder %s126, %s142
      %p144 = scmp.eq.s32.totalorder %s40, 0
      %p145 = por %p143, %p144
      %s146 = ssub.s32 %s34, %s41
      %p147 = scmp.eq.s32.totalorder %s146, 0
      %s149 = sadd.s32 %s148, 1
      %s150 = scalar_select %p147, %s148, %s149
      %p153 = pneg %p147
      %p154 = scmp.eq.s32.totalorder %s34, 1
      %p155 = por %p153, %p154
      %p156 = scmp.ne.s32.totalorder %s148, %s151
      %p157 = scmp.eq.s32.totalorder %s34, 0
      %p158 = por %p156, %p157
      %p159 = scmp.ne.s32.totalorder %s148, %s151
      %p160 = scmp.eq.s32.totalorder %s39, 1
      %p161 = por %p159, %p160
      %p162 = scmp.ne.s32.totalorder %s151, %s152
      %p163 = scmp.eq.s32.totalorder %s39, 0
      %p164 = por %p162, %p163
      %p165 = scmp.ne.s32.totalorder %s151, %s152
      %p166 = scmp.eq.s32.totalorder %s40, 1
      %p167 = por %p165, %p166
      %p169 = scmp.ne.s32.totalorder %s152, %s168
      %p170 = scmp.eq.s32.totalorder %s40, 0
      %p171 = por %p169, %p170
      %s173 = sadd.s32 %s172, 1
      %p176 = scmp.eq.s32.totalorder %s34, 1
      %p177 = scmp.ne.s32.totalorder %s172, %s174
      %p178 = scmp.eq.s32.totalorder %s34, 0
      %p179 = por %p177, %p178
      %p180 = scmp.ne.s32.totalorder %s172, %s174
      %p181 = scmp.eq.s32.totalorder %s39, 1
      %p182 = por %p180, %p181
      %p183 = scmp.ne.s32.totalorder %s174, %s175
      %p184 = scmp.eq.s32.totalorder %s39, 0
      %p185 = por %p183, %p184
      %p186 = scmp.ne.s32.totalorder %s174, %s175
      %p187 = scmp.eq.s32.totalorder %s40, 1
      %p188 = por %p186, %p187
      %p190 = scmp.ne.s32.totalorder %s175, %s189
      %p191 = scmp.eq.s32.totalorder %s40, 0
      %p192 = por %p190, %p191
      %s194 = sadd.s32 %s193, 1
      %p197 = scmp.eq.s32.totalorder %s34, 1
      %p198 = scmp.ne.s32.totalorder %s193, %s195
      %p199 = scmp.eq.s32.totalorder %s34, 0
      %p200 = por %p198, %p199
      %p201 = scmp.ne.s32.totalorder %s193, %s195
      %p202 = scmp.eq.s32.totalorder %s39, 1
      %p203 = por %p201, %p202
      %p204 = scmp.ne.s32.totalorder %s195, %s196
      %p205 = scmp.eq.s32.totalorder %s39, 0
      %p206 = por %p204, %p205
      %p207 = scmp.ne.s32.totalorder %s195, %s196
      %p208 = scmp.eq.s32.totalorder %s40, 1
      %p209 = por %p207, %p208
      %p211 = scmp.ne.s32.totalorder %s196, %s210
      %p212 = scmp.eq.s32.totalorder %s40, 0
      %p213 = por %p211, %p212
      %s215 = sadd.s32 %s214, 1
      %p218 = scmp.eq.s32.totalorder %s34, 1
      %p219 = scmp.ne.s32.totalorder %s214, %s216
      %p220 = scmp.eq.s32.totalorder %s34, 0
      %p221 = por %p219, %p220
      %p222 = scmp.ne.s32.totalorder %s214, %s216
      %p223 = scmp.eq.s32.totalorder %s39, 1
      %p224 = por %p222, %p223
      %p225 = scmp.ne.s32.totalorder %s216, %s217
      %p226 = scmp.eq.s32.totalorder %s39, 0
      %p227 = por %p225, %p226
      %p228 = scmp.ne.s32.totalorder %s216, %s217
      %p229 = scmp.eq.s32.totalorder %s40, 1
      %p230 = por %p228, %p229
      %p232 = scmp.ne.s32.totalorder %s217, %s231
      %p233 = scmp.eq.s32.totalorder %s40, 0
      %p234 = por %p232, %p233
      %s236 = sadd.s32 %s235, 1
      %p239 = scmp.eq.s32.totalorder %s34, 1
      %p240 = scmp.ne.s32.totalorder %s235, %s237
      %p241 = scmp.eq.s32.totalorder %s34, 0
      %p242 = por %p240, %p241
      %p243 = scmp.ne.s32.totalorder %s235, %s237
      %p244 = scmp.eq.s32.totalorder %s39, 1
      %p245 = por %p243, %p244
      %p246 = scmp.ne.s32.totalorder %s237, %s238
      %p247 = scmp.eq.s32.totalorder %s39, 0
      %p248 = por %p246, %p247
      %p249 = scmp.ne.s32.totalorder %s237, %s238
      %p250 = scmp.eq.s32.totalorder %s40, 1
      %p251 = por %p249, %p250
      %p253 = scmp.ne.s32.totalorder %s238, %s252
      %p254 = scmp.eq.s32.totalorder %s40, 0
      %p255 = por %p253, %p254
      %s257 = sadd.s32 %s256, 1
      %p260 = scmp.eq.s32.totalorder %s34, 1
      %p261 = scmp.ne.s32.totalorder %s256, %s258
      %p262 = scmp.eq.s32.totalorder %s34, 0
      %p263 = por %p261, %p262
      %p264 = scmp.ne.s32.totalorder %s256, %s258
      %p265 = scmp.eq.s32.totalorder %s39, 1
      %p266 = por %p264, %p265
      %p267 = scmp.ne.s32.totalorder %s258, %s259
      %p268 = scmp.eq.s32.totalorder %s39, 0
      %p269 = por %p267, %p268
      %p270 = scmp.ne.s32.totalorder %s258, %s259
      %p271 = scmp.eq.s32.totalorder %s40, 1
      %p272 = por %p270, %p271
      %p274 = scmp.ne.s32.totalorder %s259, %s273
      %p275 = scmp.eq.s32.totalorder %s40, 0
      %p276 = por %p274, %p275
      %s278 = sadd.s32 %s277, 1
      %p281 = scmp.eq.s32.totalorder %s34, 1
      %p282 = scmp.ne.s32.totalorder %s277, %s279
      %p283 = scmp.eq.s32.totalorder %s34, 0
      %p284 = por %p282, %p283
      %p285 = scmp.ne.s32.totalorder %s277, %s279
      %p286 = scmp.eq.s32.totalorder %s39, 1
      %p287 = por %p285, %p286
      %p288 = scmp.ne.s32.totalorder %s279, %s280
      %p289 = scmp.eq.s32.totalorder %s39, 0
      %p290 = por %p288, %p289
      %p291 = scmp.ne.s32.totalorder %s279, %s280
      %p292 = scmp.eq.s32.totalorder %s40, 1
      %p293 = por %p291, %p292
      %p295 = scmp.ne.s32.totalorder %s280, %s294
      %p296 = scmp.eq.s32.totalorder %s40, 0
      %p297 = por %p295, %p296
      %s299 = sadd.s32 %s298, 1
      %p302 = scmp.eq.s32.totalorder %s34, 1
      %p303 = scmp.ne.s32.totalorder %s298, %s300
      %p304 = scmp.eq.s32.totalorder %s34, 0
      %p305 = por %p303, %p304
      %p306 = scmp.ne.s32.totalorder %s298, %s300
      %p307 = scmp.eq.s32.totalorder %s39, 1
      %p308 = por %p306, %p307
      %p309 = scmp.ne.s32.totalorder %s300, %s301
      %p310 = scmp.eq.s32.totalorder %s39, 0
      %p311 = por %p309, %p310
      %p312 = scmp.ne.s32.totalorder %s300, %s301
      %p313 = scmp.eq.s32.totalorder %s40, 1
      %p314 = por %p312, %p313
      %p316 = scmp.ne.s32.totalorder %s301, %s315
      %p317 = scmp.eq.s32.totalorder %s40, 0
      %p318 = por %p316, %p317
      %s320 = sadd.s32 %s319, 1
      %p323 = scmp.eq.s32.totalorder %s34, 1
      %p324 = scmp.ne.s32.totalorder %s319, %s321
      %p325 = scmp.eq.s32.totalorder %s34, 0
      %p326 = por %p324, %p325
      %p327 = scmp.ne.s32.totalorder %s319, %s321
      %p328 = scmp.eq.s32.totalorder %s39, 1
      %p329 = por %p327, %p328
      %p330 = scmp.ne.s32.totalorder %s321, %s322
      %p331 = scmp.eq.s32.totalorder %s39, 0
      %p332 = por %p330, %p331
      %p333 = scmp.ne.s32.totalorder %s321, %s322
      %p334 = scmp.eq.s32.totalorder %s40, 1
      %p335 = por %p333, %p334
      %p337 = scmp.ne.s32.totalorder %s322, %s336
      %p338 = scmp.eq.s32.totalorder %s40, 0
      %p339 = por %p337, %p338
      %s340 = ssub.s32 %s34, %s41
      %p341 = scmp.eq.s32.totalorder %s340, 0
      %s343 = sadd.s32 %s342, 1
      %s344 = scalar_select %p341, %s342, %s343
      %p347 = pneg %p341
      %p348 = scmp.eq.s32.totalorder %s34, 1
      %p349 = por %p347, %p348
      %p350 = scmp.ne.s32.totalorder %s342, %s345
      %p351 = scmp.eq.s32.totalorder %s34, 0
      %p352 = por %p350, %p351
      %p353 = scmp.ne.s32.totalorder %s342, %s345
      %p354 = scmp.eq.s32.totalorder %s39, 1
      %p355 = por %p353, %p354
      %p356 = scmp.ne.s32.totalorder %s345, %s346
      %p357 = scmp.eq.s32.totalorder %s39, 0
      %p358 = por %p356, %p357
      %p359 = scmp.ne.s32.totalorder %s345, %s346
      %p360 = scmp.eq.s32.totalorder %s40, 1
      %p361 = por %p359, %p360
      %p363 = scmp.ne.s32.totalorder %s346, %s362
      %p364 = scmp.eq.s32.totalorder %s40, 0
      %p365 = por %p363, %p364
      %p366 = scmp.le.s32.totalorder 1, %s34
      %p367 = scmp.lt.s32.totalorder %s34, 3
      %p368 = pnand %p366, %p367
      %p369 = pneg %p368
      // Predicated region
      $region9: #{tpu_custom_call.1} parent=5 // pred_check
        _
      $region10: #{tpu_custom_call.1} parent=5 // pred_check_branch
        %371 = sbr.rel (%p368) target = $region12
      $region11: #{tpu_custom_call.1} parent=5 // pred_region
        %s372 = ssub.s32 %s34, 1
        // Predicated region
        $region13: #{tpu_custom_call.1} parent=11 // pred_check
          %p373 = pneg %p185
        $region14: #{tpu_custom_call.1} parent=11 // pred_check_branch
          %375 = sbr.rel (%p373) target = $region16
        $region15: #{tpu_custom_call.1} parent=11 // pred_region
          %s377 = ssub.s32 512, 512
          %378 = vsyncadd [#allocation12], %s377
          %s379 = sshll.u32 [#allocation11], 4
          %s380 = int_to_ptr.vmem [resolvable:$true] %s379
          %385 = dma.hbm_to_vmem [thread:$0]  %s5, 512, %s380, [#allocation12], 128, 128, 8
        $region16: #{tpu_custom_call.1} parent=11 // pred_fallthru
          _
        // Predicated region
        $region17: #{tpu_custom_call.1} parent=11 // pred_check
          %p386 = pneg %p206
        $region18: #{tpu_custom_call.1} parent=11 // pred_check_branch
          %388 = sbr.rel (%p386) target = $region20
        $region19: #{tpu_custom_call.1} parent=11 // pred_region
          %s390 = ssub.s32 512, 512
          %391 = vsyncadd [#allocation12], %s390
          %s392 = sshll.u32 [#allocation13], 4
          %s393 = int_to_ptr.vmem [resolvable:$true] %s392
          %398 = dma.hbm_to_vmem [thread:$0]  %s6, 512, %s393, [#allocation12], 128, 128, 8
        $region20: #{tpu_custom_call.1} parent=11 // pred_fallthru
          _
        // Predicated region
        $region21: #{tpu_custom_call.1} parent=11 // pred_check
          %p399 = pneg %p227
        $region22: #{tpu_custom_call.1} parent=11 // pred_check_branch
          %401 = sbr.rel (%p399) target = $region24
        $region23: #{tpu_custom_call.1} parent=11 // pred_region
          %s403 = ssub.s32 512, 512
          %404 = vsyncadd [#allocation15], %s403
          %s405 = sshll.u32 [#allocation14], 4
          %s406 = int_to_ptr.vmem [resolvable:$true] %s405
          %411 = dma.hbm_to_vmem [thread:$0]  %s7, 512, %s406, [#allocation15], 128, 128, 8
        $region24: #{tpu_custom_call.1} parent=11 // pred_fallthru
          _
        // Predicated region
        $region25: #{tpu_custom_call.1} parent=11 // pred_check
          %p412 = pneg %p248
        $region26: #{tpu_custom_call.1} parent=11 // pred_check_branch
          %414 = sbr.rel (%p412) target = $region28
        $region27: #{tpu_custom_call.1} parent=11 // pred_region
          _
        $region28: #{tpu_custom_call.1} parent=11 // pred_fallthru
          _
        // Predicated region
        $region29: #{tpu_custom_call.1} parent=11 // pred_check
          %p415 = pneg %p269
        $region30: #{tpu_custom_call.1} parent=11 // pred_check_branch
          %417 = sbr.rel (%p415) target = $region32
        $region31: #{tpu_custom_call.1} parent=11 // pred_region
          _
        $region32: #{tpu_custom_call.1} parent=11 // pred_fallthru
          _
        // Predicated region
        $region33: #{tpu_custom_call.1} parent=11 // pred_check
          %p418 = pneg %p290
        $region34: #{tpu_custom_call.1} parent=11 // pred_check_branch
          %420 = sbr.rel (%p418) target = $region36
        $region35: #{tpu_custom_call.1} parent=11 // pred_region
          %s422 = ssub.s32 512, 512
          %423 = vsyncadd [#allocation15], %s422
          %s424 = sshll.u32 [#allocation16], 4
          %s425 = int_to_ptr.vmem [resolvable:$true] %s424
          %430 = dma.hbm_to_vmem [thread:$0]  %s10, 512, %s425, [#allocation15], 128, 128, 8
        $region36: #{tpu_custom_call.1} parent=11 // pred_fallthru
          _
        // Predicated region
        $region37: #{tpu_custom_call.1} parent=11 // pred_check
          %p431 = pneg %p311
        $region38: #{tpu_custom_call.1} parent=11 // pred_check_branch
          %433 = sbr.rel (%p431) target = $region40
        $region39: #{tpu_custom_call.1} parent=11 // pred_region
          %s435 = ssub.s32 512, 512
          %436 = vsyncadd [#allocation18], %s435
          %s437 = sshll.u32 [#allocation17], 4
          %s438 = int_to_ptr.vmem [resolvable:$true] %s437
          %443 = dma.hbm_to_vmem [thread:$0]  %s11, 512, %s438, [#allocation18], 128, 128, 8
        $region40: #{tpu_custom_call.1} parent=11 // pred_fallthru
          _
        // Predicated region
        $region41: #{tpu_custom_call.1} parent=11 // pred_check
          %p444 = pneg %p332
        $region42: #{tpu_custom_call.1} parent=11 // pred_check_branch
          %446 = sbr.rel (%p444) target = $region44
        $region43: #{tpu_custom_call.1} parent=11 // pred_region
          _
        $region44: #{tpu_custom_call.1} parent=11 // pred_fallthru
          _
      $region12: #{tpu_custom_call.1} parent=5 // pred_fallthru
        _
      %p447 = scmp.lt.s32.totalorder %s34, 2
      // Predicated region
      $region45: #{tpu_custom_call.1} parent=5 // pred_check
        %p448 = pneg %p447
      $region46: #{tpu_custom_call.1} parent=5 // pred_check_branch
        %450 = sbr.rel (%p448) target = $region48
      $region47: #{tpu_custom_call.1} parent=5 // pred_region
        // Predicated region
        $region49: #{tpu_custom_call.1} parent=47 // pred_check
          %p451 = pneg %p54
        $region50: #{tpu_custom_call.1} parent=47 // pred_check_branch
          %453 = sbr.rel (%p451) target = $region52
        $region51: #{tpu_custom_call.1} parent=47 // pred_region
          %s454 = sand.u32 %s44, 1
          %s455 = scalar_lea.sflag [#allocation3], %s454
          %s456 = sand.u32 %s44, 1
          %s457 = smul.addr %s456, 32
          %s458 = scalar_lea.vmem [#allocation2], %s457
          %s459 = smul.u32 4, %s34
          %s461 = ssub.s32 512, 512
          %462 = vsyncadd %s455, %s461
          %s463 = smul.addr %s459, 128
          %s464 = scalar_lea.hbm %s0, %s463
          %s465 = sshll.u32 %s458, 4
          %s466 = int_to_ptr.vmem [resolvable:$true] %s465
          %471 = dma.hbm_to_vmem [thread:$0]  %s464, 512, %s466, %s455, 128, 128, 8
        $region52: #{tpu_custom_call.1} parent=47 // pred_fallthru
          _
        // Predicated region
        $region53: #{tpu_custom_call.1} parent=47 // pred_check
          %p472 = pneg %p80
        $region54: #{tpu_custom_call.1} parent=47 // pred_check_branch
          %474 = sbr.rel (%p472) target = $region56
        $region55: #{tpu_custom_call.1} parent=47 // pred_region
          %s475 = sand.u32 %s34, 1
          %s476 = scalar_lea.sflag [#allocation6], %s475
          %s477 = sand.u32 %s70, 1
          %s478 = smul.addr %s477, 32
          %s479 = scalar_lea.vmem [#allocation5], %s478
          %s480 = smul.u32 4, %s34
          %s482 = ssub.s32 512, 512
          %483 = vsyncadd %s476, %s482
          %s484 = smul.addr %s480, 128
          %s485 = scalar_lea.hbm %s1, %s484
          %s486 = sshll.u32 %s479, 4
          %s487 = int_to_ptr.vmem [resolvable:$true] %s486
          %492 = dma.hbm_to_vmem [thread:$0]  %s485, 512, %s487, %s476, 128, 128, 8
        $region56: #{tpu_custom_call.1} parent=47 // pred_fallthru
          _
        // Predicated region
        $region57: #{tpu_custom_call.1} parent=47 // pred_check
          %p493 = pneg %p106
        $region58: #{tpu_custom_call.1} parent=47 // pred_check_branch
          %495 = sbr.rel (%p493) target = $region60
        $region59: #{tpu_custom_call.1} parent=47 // pred_region
          %s496 = sand.u32 %s34, 1
          %s497 = scalar_lea.sflag [#allocation6], %s496
          %s498 = sand.u32 %s96, 1
          %s499 = smul.addr %s498, 64
          %s500 = scalar_lea.vmem [#allocation7], %s499
          %s501 = smul.u32 4, %s34
          %s503 = ssub.s32 1024, 1024
          %504 = vsyncadd %s497, %s503
          %s505 = smul.addr %s501, 2
          %s506 = smul.addr %s505, 128
          %s507 = scalar_lea.hbm %s2, %s506
          %s508 = sshll.u32 %s500, 4
          %s509 = int_to_ptr.vmem [resolvable:$true] %s508
          %514 = dma.hbm_to_vmem [thread:$0]  %s507, 1024, %s509, %s497, 128, 128, 8
        $region60: #{tpu_custom_call.1} parent=47 // pred_fallthru
          _
        // Predicated region
        $region61: #{tpu_custom_call.1} parent=47 // pred_check
          %p515 = pneg %p132
        $region62: #{tpu_custom_call.1} parent=47 // pred_check_branch
          %517 = sbr.rel (%p515) target = $region64
        $region63: #{tpu_custom_call.1} parent=47 // pred_region
          %s518 = sand.u32 %s34, 1
          %s519 = scalar_lea.sflag [#allocation9], %s518
          %s520 = sand.u32 %s122, 1
          %s521 = smul.addr %s520, 64
          %s522 = scalar_lea.vmem [#allocation8], %s521
          %s523 = smul.u32 4, %s34
          %s525 = ssub.s32 1024, 1024
          %526 = vsyncadd %s519, %s525
          %s527 = smul.addr %s523, 2
          %s528 = smul.addr %s527, 128
          %s529 = scalar_lea.hbm %s3, %s528
          %s530 = sshll.u32 %s522, 4
          %s531 = int_to_ptr.vmem [resolvable:$true] %s530
          %536 = dma.hbm_to_vmem [thread:$0]  %s529, 1024, %s531, %s519, 128, 128, 8
        $region64: #{tpu_custom_call.1} parent=47 // pred_fallthru
          _
        // Predicated region
        $region65: #{tpu_custom_call.1} parent=47 // pred_check
          %p537 = pneg %p158
        $region66: #{tpu_custom_call.1} parent=47 // pred_check_branch
          %539 = sbr.rel (%p537) target = $region68
        $region67: #{tpu_custom_call.1} parent=47 // pred_region
          %s540 = sand.u32 %s34, 1
          %s541 = scalar_lea.sflag [#allocation9], %s540
          %s542 = sand.u32 %s148, 1
          %s543 = smul.addr %s542, 32
          %s544 = scalar_lea.vmem [#allocation10], %s543
          %s545 = smul.u32 4, %s34
          %s547 = ssub.s32 512, 512
          %548 = vsyncadd %s541, %s547
          %s549 = smul.addr %s545, 128
          %s550 = scalar_lea.hbm %s4, %s549
          %s551 = sshll.u32 %s544, 4
          %s552 = int_to_ptr.vmem [resolvable:$true] %s551
          %557 = dma.hbm_to_vmem [thread:$0]  %s550, 512, %s552, %s541, 128, 128, 8
        $region68: #{tpu_custom_call.1} parent=47 // pred_fallthru
          _
      $region48: #{tpu_custom_call.1} parent=5 // pred_fallthru
        _
      %p558 = scmp.le.s32.totalorder 1, %s34
      %p559 = scmp.lt.s32.totalorder %s34, 3
      %p560 = pnand %p558, %p559
      %p561 = pneg %p560
      // Predicated region
      $region69: #{tpu_custom_call.1} parent=5 // pred_check
        _
      $region70: #{tpu_custom_call.1} parent=5 // pred_check_branch
        %563 = sbr.rel (%p560) target = $region72
      $region71: #{tpu_custom_call.1} parent=5 // pred_region
        %s564 = ssub.s32 %s34, 1
        %s565 = sand.u32 %s47, 1
        %s566 = scalar_lea.sflag [#allocation3], %s565
        %s567 = sand.u32 %s47, 1
        %s568 = smul.addr %s567, 32
        %s569 = scalar_lea.vmem [#allocation2], %s568
        // Predicated region
        $region73: #{tpu_custom_call.1} parent=71 // pred_check
          %p570 = pneg %p60
        $region74: #{tpu_custom_call.1} parent=71 // pred_check_branch
          %572 = sbr.rel (%p570) target = $region76
        $region75: #{tpu_custom_call.1} parent=71 // pred_region
          %573 = dma.done %s566, 512
        $region76: #{tpu_custom_call.1} parent=71 // pred_fallthru
          _
        %s574 = sand.u32 %s39, 1
        %s575 = scalar_lea.sflag [#allocation6], %s574
        %s576 = sand.u32 %s73, 1
        %s577 = smul.addr %s576, 32
        %s578 = scalar_lea.vmem [#allocation5], %s577
        // Predicated region
        $region77: #{tpu_custom_call.1} parent=71 // pred_check
          %p579 = pneg %p86
        $region78: #{tpu_custom_call.1} parent=71 // pred_check_branch
          %581 = sbr.rel (%p579) target = $region80
        $region79: #{tpu_custom_call.1} parent=71 // pred_region
          %582 = dma.done %s575, 512
        $region80: #{tpu_custom_call.1} parent=71 // pred_fallthru
          _
        %s583 = sand.u32 %s39, 1
        %s584 = scalar_lea.sflag [#allocation6], %s583
        %s585 = sand.u32 %s99, 1
        %s586 = smul.addr %s585, 64
        %s587 = scalar_lea.vmem [#allocation7], %s586
        // Predicated region
        $region81: #{tpu_custom_call.1} parent=71 // pred_check
          %p588 = pneg %p112
        $region82: #{tpu_custom_call.1} parent=71 // pred_check_branch
          %590 = sbr.rel (%p588) target = $region84
        $region83: #{tpu_custom_call.1} parent=71 // pred_region
          %591 = dma.done %s584, 1024
        $region84: #{tpu_custom_call.1} parent=71 // pred_fallthru
          _
        %s592 = sand.u32 %s39, 1
        %s593 = scalar_lea.sflag [#allocation9], %s592
        %s594 = sand.u32 %s125, 1
        %s595 = smul.addr %s594, 64
        %s596 = scalar_lea.vmem [#allocation8], %s595
        // Predicated region
        $region85: #{tpu_custom_call.1} parent=71 // pred_check
          %p597 = pneg %p138
        $region86: #{tpu_custom_call.1} parent=71 // pred_check_branch
          %599 = sbr.rel (%p597) target = $region88
        $region87: #{tpu_custom_call.1} parent=71 // pred_region
          %600 = dma.done %s593, 1024
        $region88: #{tpu_custom_call.1} parent=71 // pred_fallthru
          _
        %s601 = sand.u32 %s39, 1
        %s602 = scalar_lea.sflag [#allocation9], %s601
        %s603 = sand.u32 %s151, 1
        %s604 = smul.addr %s603, 32
        %s605 = scalar_lea.vmem [#allocation10], %s604
        // Predicated region
        $region89: #{tpu_custom_call.1} parent=71 // pred_check
          %p606 = pneg %p164
        $region90: #{tpu_custom_call.1} parent=71 // pred_check_branch
          %608 = sbr.rel (%p606) target = $region92
        $region91: #{tpu_custom_call.1} parent=71 // pred_region
          %609 = dma.done %s602, 512
        $region92: #{tpu_custom_call.1} parent=71 // pred_fallthru
          _
        // Predicated region
        $region93: #{tpu_custom_call.1} parent=71 // pred_check
          %p610 = pneg %p185
        $region94: #{tpu_custom_call.1} parent=71 // pred_check_branch
          %612 = sbr.rel (%p610) target = $region96
        $region95: #{tpu_custom_call.1} parent=71 // pred_region
          %613 = dma.done [#allocation12], 512
        $region96: #{tpu_custom_call.1} parent=71 // pred_fallthru
          _
        // Predicated region
        $region97: #{tpu_custom_call.1} parent=71 // pred_check
          %p614 = pneg %p206
        $region98: #{tpu_custom_call.1} parent=71 // pred_check_branch
          %616 = sbr.rel (%p614) target = $region100
        $region99: #{tpu_custom_call.1} parent=71 // pred_region
          %617 = dma.done [#allocation12], 512
        $region100: #{tpu_custom_call.1} parent=71 // pred_fallthru
          _
        // Predicated region
        $region101: #{tpu_custom_call.1} parent=71 // pred_check
          %p618 = pneg %p227
        $region102: #{tpu_custom_call.1} parent=71 // pred_check_branch
          %620 = sbr.rel (%p618) target = $region104
        $region103: #{tpu_custom_call.1} parent=71 // pred_region
          %621 = dma.done [#allocation15], 512
        $region104: #{tpu_custom_call.1} parent=71 // pred_fallthru
          _
        // Predicated region
        $region105: #{tpu_custom_call.1} parent=71 // pred_check
          %p622 = pneg %p290
        $region106: #{tpu_custom_call.1} parent=71 // pred_check_branch
          %624 = sbr.rel (%p622) target = $region108
        $region107: #{tpu_custom_call.1} parent=71 // pred_region
          %625 = dma.done [#allocation15], 512
        $region108: #{tpu_custom_call.1} parent=71 // pred_fallthru
          _
        // Predicated region
        $region109: #{tpu_custom_call.1} parent=71 // pred_check
          %p626 = pneg %p311
        $region110: #{tpu_custom_call.1} parent=71 // pred_check_branch
          %628 = sbr.rel (%p626) target = $region112
        $region111: #{tpu_custom_call.1} parent=71 // pred_region
          %629 = dma.done [#allocation18], 512
        $region112: #{tpu_custom_call.1} parent=71 // pred_fallthru
          _
        %s630 = sand.u32 %s47, 1
        %s631 = scalar_lea.sflag [#allocation3], %s630
        %s632 = sand.u32 %s47, 1
        %s633 = smul.addr %s632, 32
        %s634 = scalar_lea.vmem [#allocation2], %s633
        %p635 = pneg %p60
        %p636 = pneg %p57
        %s637 = sand.u32 %s39, 1
        %s638 = scalar_lea.sflag [#allocation6], %s637
        %s639 = sand.u32 %s73, 1
        %s640 = smul.addr %s639, 32
        %s641 = scalar_lea.vmem [#allocation5], %s640
        %p642 = pneg %p86
        %p643 = pneg %p83
        %s644 = sand.u32 %s39, 1
        %s645 = scalar_lea.sflag [#allocation6], %s644
        %s646 = sand.u32 %s99, 1
        %s647 = smul.addr %s646, 64
        %s648 = scalar_lea.vmem [#allocation7], %s647
        %p649 = pneg %p112
        %p650 = pneg %p109
        %s651 = sand.u32 %s39, 1
        %s652 = scalar_lea.sflag [#allocation9], %s651
        %s653 = sand.u32 %s125, 1
        %s654 = smul.addr %s653, 64
        %s655 = scalar_lea.vmem [#allocation8], %s654
        %p656 = pneg %p138
        %p657 = pneg %p135
        %s658 = sand.u32 %s39, 1
        %s659 = scalar_lea.sflag [#allocation9], %s658
        %s660 = sand.u32 %s151, 1
        %s661 = smul.addr %s660, 32
        %s662 = scalar_lea.vmem [#allocation10], %s661
        %p663 = pneg %p164
        %p664 = pneg %p161
        %p665 = pneg %p185
        %p666 = pneg %p182
        %p667 = pneg %p206
        %p668 = pneg %p203
        %p669 = pneg %p227
        %p670 = pneg %p224
        %p671 = pneg %p248
        %p672 = pneg %p245
        %p673 = pneg %p269
        %p674 = pneg %p266
        %p675 = pneg %p290
        %p676 = pneg %p287
        %p677 = pneg %p311
        %p678 = pneg %p308
        %p679 = pneg %p332
        %p680 = pneg %p329
        %p681 = pneg %p358
        %p682 = pneg %p355
        %s683 = sand.u32 %s345, 1
        %s684 = scalar_lea.sflag [#allocation4], %s683
        %s685 = sand.u32 %s345, 1
        %s686 = smul.addr %s685, 32
        %s687 = scalar_lea.vmem [#allocation19], %s686
        %s688 = smul.u32 4, %s39
        %s689 = smul.u32 4, %s39
        %s690 = smul.u32 4, %s39
        %s691 = smul.u32 4, %s39
        %s692 = smul.u32 4, %s39
        %s693 = smul.u32 4, %s39
        %v694 = vld [vmem:[%s569] sm:$0xff]
        %v695 = vld [vmem:[%s587] sm:$0xff]
        %v696 = vld [vmem:[%s587 + $0x8] sm:$0xff]
        %vm697 = vcmask 130048
        %v699 = vsel %vm697, %v694, 0
        %701 = vmatprep.subr.mxu0 0.0
        %702 = vmatpush1.msra.mxu0 %v695
        %703 = vmatprep.subr.mxu0 0.0
        %704 = vmatpush1.msra.mxu0 %v696
        %705 = vmatprep.subr.mxu0 0.0
        %706 = vmatpush1.msra.mxu0 0.0
        %707 = vmatprep.subr.mxu0 0.0
        %708 = vmatpush1.msra.mxu0 0.0
        %709 = vmatprep.subr.mxu0 0.0
        %710 = vmatpush1.msra.mxu0 0.0
        %711 = vmatprep.subr.mxu0 0.0
        %712 = vmatpush1.msra.mxu0 0.0
        %713 = vmatprep.subr.mxu0 0.0
        %714 = vmatpush1.msra.mxu0 0.0
        %715 = vmatprep.subr.mxu0 0.0
        %716 = vmatpush1.msra.mxu0 0.0
        %717 = vmatprep.subr.mxu0 0.0
        %718 = vmatpush1.msra.mxu0 0.0
        %719 = vmatprep.subr.mxu0 0.0
        %720 = vmatpush1.msra.mxu0 0.0
        %721 = vmatprep.subr.mxu0 0.0
        %722 = vmatpush1.msra.mxu0 0.0
        %723 = vmatprep.subr.mxu0 0.0
        %724 = vmatpush1.msra.mxu0 0.0
        %725 = vmatprep.subr.mxu0 0.0
        %726 = vmatpush1.msra.mxu0 0.0
        %727 = vmatprep.subr.mxu0 0.0
        %728 = vmatpush1.msra.mxu0 0.0
        %729 = vmatprep.subr.mxu0 0.0
        %730 = vmatpush1.msra.mxu0 0.0
        %731 = vmatprep.subr.mxu0 0.0
        %732 = vmatpush1.msra.mxu0 0.0
        %733 = vmatprep.subr.mxu0 0.0
        %734 = vmatpush1.msra.mxu0 0.0
        %735 = vmatprep.subr.mxu0 0.0
        %736 = vmatpush1.msra.mxu0 0.0
        %737 = vmatprep.subr.mxu0 0.0
        %738 = vmatpush1.msra.mxu0 0.0
        %739 = vmatprep.subr.mxu0 0.0
        %740 = vmatpush1.msra.mxu0 0.0
        %741 = vmatprep.subr.mxu0 0.0
        %742 = vmatpush1.msra.mxu0 0.0
        %743 = vmatprep.subr.mxu0 0.0
        %744 = vmatpush1.msra.mxu0 0.0
        %745 = vmatprep.subr.mxu0 0.0
        %746 = vmatpush1.msra.mxu0 0.0
        %747 = vmatprep.subr.mxu0 0.0
        %748 = vmatpush1.msra.mxu0 0.0
        %749 = vmatprep.subr.mxu0 0.0
        %750 = vmatpush1.msra.mxu0 0.0
        %751 = vmatprep.subr.mxu0 0.0
        %752 = vmatpush1.msra.mxu0 0.0
        %753 = vmatprep.subr.mxu0 0.0
        %754 = vmatpush1.msra.mxu0 0.0
        %755 = vmatprep.subr.mxu0 0.0
        %756 = vmatpush1.msra.mxu0 0.0
        %757 = vmatprep.subr.mxu0 0.0
        %758 = vmatpush1.msra.mxu0 0.0
        %759 = vmatprep.subr.mxu0 0.0
        %760 = vmatpush1.msra.mxu0 0.0
        %761 = vmatprep.subr.mxu0 0.0
        %762 = vmatpush1.msra.mxu0 0.0
        %763 = vmatprep.subr.mxu0 0.0
        %764 = vmatpush1.msra.mxu0 0.0
        %765 = vmatprep.mubr.f32.mxu0 0.0
        %766 = vmatmul.mubr.f32.gmra.mrb[0].mxu0 %v699
        %v767 = vpop.f32.mrb[0].mxu0
        %v768 = vadd.f32 0.0, %v767
        %v769 = vpop.f32.mrb[0].mxu0
        %770 = vdwg.mxu0
        %v771 = vld [vmem:[%s578] sm:$0xff]
        %v772 = vld [vmem:[%s596] sm:$0xff]
        %v773 = vld [vmem:[%s596 + $0x8] sm:$0xff]
        %v775 = vsel %vm697, %v771, 0
        %777 = vmatprep.subr.mxu0 0.0
        %778 = vmatpush1.msra.mxu0 %v772
        %779 = vmatprep.subr.mxu0 0.0
        %780 = vmatpush1.msra.mxu0 %v773
        %781 = vmatprep.subr.mxu0 0.0
        %782 = vmatpush1.msra.mxu0 0.0
        %783 = vmatprep.subr.mxu0 0.0
        %784 = vmatpush1.msra.mxu0 0.0
        %785 = vmatprep.subr.mxu0 0.0
        %786 = vmatpush1.msra.mxu0 0.0
        %787 = vmatprep.subr.mxu0 0.0
        %788 = vmatpush1.msra.mxu0 0.0
        %789 = vmatprep.subr.mxu0 0.0
        %790 = vmatpush1.msra.mxu0 0.0
        %791 = vmatprep.subr.mxu0 0.0
        %792 = vmatpush1.msra.mxu0 0.0
        %793 = vmatprep.subr.mxu0 0.0
        %794 = vmatpush1.msra.mxu0 0.0
        %795 = vmatprep.subr.mxu0 0.0
        %796 = vmatpush1.msra.mxu0 0.0
        %797 = vmatprep.subr.mxu0 0.0
        %798 = vmatpush1.msra.mxu0 0.0
        %799 = vmatprep.subr.mxu0 0.0
        %800 = vmatpush1.msra.mxu0 0.0
        %801 = vmatprep.subr.mxu0 0.0
        %802 = vmatpush1.msra.mxu0 0.0
        %803 = vmatprep.subr.mxu0 0.0
        %804 = vmatpush1.msra.mxu0 0.0
        %805 = vmatprep.subr.mxu0 0.0
        %806 = vmatpush1.msra.mxu0 0.0
        %807 = vmatprep.subr.mxu0 0.0
        %808 = vmatpush1.msra.mxu0 0.0
        %809 = vmatprep.subr.mxu0 0.0
        %810 = vmatpush1.msra.mxu0 0.0
        %811 = vmatprep.subr.mxu0 0.0
        %812 = vmatpush1.msra.mxu0 0.0
        %813 = vmatprep.subr.mxu0 0.0
        %814 = vmatpush1.msra.mxu0 0.0
        %815 = vmatprep.subr.mxu0 0.0
        %816 = vmatpush1.msra.mxu0 0.0
        %817 = vmatprep.subr.mxu0 0.0
        %818 = vmatpush1.msra.mxu0 0.0
        %819 = vmatprep.subr.mxu0 0.0
        %820 = vmatpush1.msra.mxu0 0.0
        %821 = vmatprep.subr.mxu0 0.0
        %822 = vmatpush1.msra.mxu0 0.0
        %823 = vmatprep.subr.mxu0 0.0
        %824 = vmatpush1.msra.mxu0 0.0
        %825 = vmatprep.subr.mxu0 0.0
        %826 = vmatpush1.msra.mxu0 0.0
        %827 = vmatprep.subr.mxu0 0.0
        %828 = vmatpush1.msra.mxu0 0.0
        %829 = vmatprep.subr.mxu0 0.0
        %830 = vmatpush1.msra.mxu0 0.0
        %831 = vmatprep.subr.mxu0 0.0
        %832 = vmatpush1.msra.mxu0 0.0
        %833 = vmatprep.subr.mxu0 0.0
        %834 = vmatpush1.msra.mxu0 0.0
        %835 = vmatprep.subr.mxu0 0.0
        %836 = vmatpush1.msra.mxu0 0.0
        %837 = vmatprep.subr.mxu0 0.0
        %838 = vmatpush1.msra.mxu0 0.0
        %839 = vmatprep.subr.mxu0 0.0
        %840 = vmatpush1.msra.mxu0 0.0
        %841 = vmatprep.mubr.f32.mxu0 0.0
        %842 = vmatmul.mubr.f32.gmra.mrb[0].mxu0 %v775
        %v843 = vpop.f32.mrb[0].mxu0
        %v844 = vadd.f32 0.0, %v843
        %v845 = vpop.f32.mrb[0].mxu0
        %846 = vdwg.mxu0
        %s847 = scalar_lea.vmem %s569, 8 [#allocation2]
        %v848 = vld [vmem:[%s847] sm:$0xff]
        %s849 = scalar_lea.vmem %s587, 16 [#allocation7]
        %v850 = vld [vmem:[%s849] sm:$0xff]
        %v851 = vld [vmem:[%s849 + $0x8] sm:$0xff]
        %v853 = vsel %vm697, %v848, 0
        %855 = vmatprep.subr.mxu0 0.0
        %856 = vmatpush1.msra.mxu0 %v850
        %857 = vmatprep.subr.mxu0 0.0
        %858 = vmatpush1.msra.mxu0 %v851
        %859 = vmatprep.subr.mxu0 0.0
        %860 = vmatpush1.msra.mxu0 0.0
        %861 = vmatprep.subr.mxu0 0.0
        %862 = vmatpush1.msra.mxu0 0.0
        %863 = vmatprep.subr.mxu0 0.0
        %864 = vmatpush1.msra.mxu0 0.0
        %865 = vmatprep.subr.mxu0 0.0
        %866 = vmatpush1.msra.mxu0 0.0
        %867 = vmatprep.subr.mxu0 0.0
        %868 = vmatpush1.msra.mxu0 0.0
        %869 = vmatprep.subr.mxu0 0.0
        %870 = vmatpush1.msra.mxu0 0.0
        %871 = vmatprep.subr.mxu0 0.0
        %872 = vmatpush1.msra.mxu0 0.0
        %873 = vmatprep.subr.mxu0 0.0
        %874 = vmatpush1.msra.mxu0 0.0
        %875 = vmatprep.subr.mxu0 0.0
        %876 = vmatpush1.msra.mxu0 0.0
        %877 = vmatprep.subr.mxu0 0.0
        %878 = vmatpush1.msra.mxu0 0.0
        %879 = vmatprep.subr.mxu0 0.0
        %880 = vmatpush1.msra.mxu0 0.0
        %881 = vmatprep.subr.mxu0 0.0
        %882 = vmatpush1.msra.mxu0 0.0
        %883 = vmatprep.subr.mxu0 0.0
        %884 = vmatpush1.msra.mxu0 0.0
        %885 = vmatprep.subr.mxu0 0.0
        %886 = vmatpush1.msra.mxu0 0.0
        %887 = vmatprep.subr.mxu0 0.0
        %888 = vmatpush1.msra.mxu0 0.0
        %889 = vmatprep.subr.mxu0 0.0
        %890 = vmatpush1.msra.mxu0 0.0
        %891 = vmatprep.subr.mxu0 0.0
        %892 = vmatpush1.msra.mxu0 0.0
        %893 = vmatprep.subr.mxu0 0.0
        %894 = vmatpush1.msra.mxu0 0.0
        %895 = vmatprep.subr.mxu0 0.0
        %896 = vmatpush1.msra.mxu0 0.0
        %897 = vmatprep.subr.mxu0 0.0
        %898 = vmatpush1.msra.mxu0 0.0
        %899 = vmatprep.subr.mxu0 0.0
        %900 = vmatpush1.msra.mxu0 0.0
        %901 = vmatprep.subr.mxu0 0.0
        %902 = vmatpush1.msra.mxu0 0.0
        %903 = vmatprep.subr.mxu0 0.0
        %904 = vmatpush1.msra.mxu0 0.0
        %905 = vmatprep.subr.mxu0 0.0
        %906 = vmatpush1.msra.mxu0 0.0
        %907 = vmatprep.subr.mxu0 0.0
        %908 = vmatpush1.msra.mxu0 0.0
        %909 = vmatprep.subr.mxu0 0.0
        %910 = vmatpush1.msra.mxu0 0.0
        %911 = vmatprep.subr.mxu0 0.0
        %912 = vmatpush1.msra.mxu0 0.0
        %913 = vmatprep.subr.mxu0 0.0
        %914 = vmatpush1.msra.mxu0 0.0
        %915 = vmatprep.subr.mxu0 0.0
        %916 = vmatpush1.msra.mxu0 0.0
        %917 = vmatprep.subr.mxu0 0.0
        %918 = vmatpush1.msra.mxu0 0.0
        %919 = vmatprep.mubr.f32.mxu0 0.0
        %920 = vmatmul.mubr.f32.gmra.mrb[0].mxu0 %v853
        %v921 = vpop.f32.mrb[0].mxu0
        %v922 = vadd.f32 0.0, %v921
        %v923 = vpop.f32.mrb[0].mxu0
        %924 = vdwg.mxu0
        %s925 = scalar_lea.vmem %s578, 8 [#allocation5]
        %v926 = vld [vmem:[%s925] sm:$0xff]
        %s927 = scalar_lea.vmem %s596, 16 [#allocation8]
        %v928 = vld [vmem:[%s927] sm:$0xff]
        %v929 = vld [vmem:[%s927 + $0x8] sm:$0xff]
        %v931 = vsel %vm697, %v926, 0
        %933 = vmatprep.subr.mxu0 0.0
        %934 = vmatpush1.msra.mxu0 %v928
        %935 = vmatprep.subr.mxu0 0.0
        %936 = vmatpush1.msra.mxu0 %v929
        %937 = vmatprep.subr.mxu0 0.0
        %938 = vmatpush1.msra.mxu0 0.0
        %939 = vmatprep.subr.mxu0 0.0
        %940 = vmatpush1.msra.mxu0 0.0
        %941 = vmatprep.subr.mxu0 0.0
        %942 = vmatpush1.msra.mxu0 0.0
        %943 = vmatprep.subr.mxu0 0.0
        %944 = vmatpush1.msra.mxu0 0.0
        %945 = vmatprep.subr.mxu0 0.0
        %946 = vmatpush1.msra.mxu0 0.0
        %947 = vmatprep.subr.mxu0 0.0
        %948 = vmatpush1.msra.mxu0 0.0
        %949 = vmatprep.subr.mxu0 0.0
        %950 = vmatpush1.msra.mxu0 0.0
        %951 = vmatprep.subr.mxu0 0.0
        %952 = vmatpush1.msra.mxu0 0.0
        %953 = vmatprep.subr.mxu0 0.0
        %954 = vmatpush1.msra.mxu0 0.0
        %955 = vmatprep.subr.mxu0 0.0
        %956 = vmatpush1.msra.mxu0 0.0
        %957 = vmatprep.subr.mxu0 0.0
        %958 = vmatpush1.msra.mxu0 0.0
        %959 = vmatprep.subr.mxu0 0.0
        %960 = vmatpush1.msra.mxu0 0.0
        %961 = vmatprep.subr.mxu0 0.0
        %962 = vmatpush1.msra.mxu0 0.0
        %963 = vmatprep.subr.mxu0 0.0
        %964 = vmatpush1.msra.mxu0 0.0
        %965 = vmatprep.subr.mxu0 0.0
        %966 = vmatpush1.msra.mxu0 0.0
        %967 = vmatprep.subr.mxu0 0.0
        %968 = vmatpush1.msra.mxu0 0.0
        %969 = vmatprep.subr.mxu0 0.0
        %970 = vmatpush1.msra.mxu0 0.0
        %971 = vmatprep.subr.mxu0 0.0
        %972 = vmatpush1.msra.mxu0 0.0
        %973 = vmatprep.subr.mxu0 0.0
        %974 = vmatpush1.msra.mxu0 0.0
        %975 = vmatprep.subr.mxu0 0.0
        %976 = vmatpush1.msra.mxu0 0.0
        %977 = vmatprep.subr.mxu0 0.0
        %978 = vmatpush1.msra.mxu0 0.0
        %979 = vmatprep.subr.mxu0 0.0
        %980 = vmatpush1.msra.mxu0 0.0
        %981 = vmatprep.subr.mxu0 0.0
        %982 = vmatpush1.msra.mxu0 0.0
        %983 = vmatprep.subr.mxu0 0.0
        %984 = vmatpush1.msra.mxu0 0.0
        %985 = vmatprep.subr.mxu0 0.0
        %986 = vmatpush1.msra.mxu0 0.0
        %987 = vmatprep.subr.mxu0 0.0
        %988 = vmatpush1.msra.mxu0 0.0
        %989 = vmatprep.subr.mxu0 0.0
        %990 = vmatpush1.msra.mxu0 0.0
        %991 = vmatprep.subr.mxu0 0.0
        %992 = vmatpush1.msra.mxu0 0.0
        %993 = vmatprep.subr.mxu0 0.0
        %994 = vmatpush1.msra.mxu0 0.0
        %995 = vmatprep.subr.mxu0 0.0
        %996 = vmatpush1.msra.mxu0 0.0
        %997 = vmatprep.mubr.f32.mxu0 0.0
        %998 = vmatmul.mubr.f32.gmra.mrb[0].mxu0 %v931
        %v999 = vpop.f32.mrb[0].mxu0
        %v1000 = vadd.f32 0.0, %v999
        %v1001 = vpop.f32.mrb[0].mxu0
        %1002 = vdwg.mxu0
        %s1003 = scalar_lea.vmem %s569, 16 [#allocation2]
        %v1004 = vld [vmem:[%s1003] sm:$0xff]
        %s1005 = scalar_lea.vmem %s587, 32 [#allocation7]
        %v1006 = vld [vmem:[%s1005] sm:$0xff]
        %v1007 = vld [vmem:[%s1005 + $0x8] sm:$0xff]
        %v1009 = vsel %vm697, %v1004, 0
        %1011 = vmatprep.subr.mxu0 0.0
        %1012 = vmatpush1.msra.mxu0 %v1006
        %1013 = vmatprep.subr.mxu0 0.0
        %1014 = vmatpush1.msra.mxu0 %v1007
        %1015 = vmatprep.subr.mxu0 0.0
        %1016 = vmatpush1.msra.mxu0 0.0
        %1017 = vmatprep.subr.mxu0 0.0
        %1018 = vmatpush1.msra.mxu0 0.0
        %1019 = vmatprep.subr.mxu0 0.0
        %1020 = vmatpush1.msra.mxu0 0.0
        %1021 = vmatprep.subr.mxu0 0.0
        %1022 = vmatpush1.msra.mxu0 0.0
        %1023 = vmatprep.subr.mxu0 0.0
        %1024 = vmatpush1.msra.mxu0 0.0
        %1025 = vmatprep.subr.mxu0 0.0
        %1026 = vmatpush1.msra.mxu0 0.0
        %1027 = vmatprep.subr.mxu0 0.0
        %1028 = vmatpush1.msra.mxu0 0.0
        %1029 = vmatprep.subr.mxu0 0.0
        %1030 = vmatpush1.msra.mxu0 0.0
        %1031 = vmatprep.subr.mxu0 0.0
        %1032 = vmatpush1.msra.mxu0 0.0
        %1033 = vmatprep.subr.mxu0 0.0
        %1034 = vmatpush1.msra.mxu0 0.0
        %1035 = vmatprep.subr.mxu0 0.0
        %1036 = vmatpush1.msra.mxu0 0.0
        %1037 = vmatprep.subr.mxu0 0.0
        %1038 = vmatpush1.msra.mxu0 0.0
        %1039 = vmatprep.subr.mxu0 0.0
        %1040 = vmatpush1.msra.mxu0 0.0
        %1041 = vmatprep.subr.mxu0 0.0
        %1042 = vmatpush1.msra.mxu0 0.0
        %1043 = vmatprep.subr.mxu0 0.0
        %1044 = vmatpush1.msra.mxu0 0.0
        %1045 = vmatprep.subr.mxu0 0.0
        %1046 = vmatpush1.msra.mxu0 0.0
        %1047 = vmatprep.subr.mxu0 0.0
        %1048 = vmatpush1.msra.mxu0 0.0
        %1049 = vmatprep.subr.mxu0 0.0
        %1050 = vmatpush1.msra.mxu0 0.0
        %1051 = vmatprep.subr.mxu0 0.0
        %1052 = vmatpush1.msra.mxu0 0.0
        %1053 = vmatprep.subr.mxu0 0.0
        %1054 = vmatpush1.msra.mxu0 0.0
        %1055 = vmatprep.subr.mxu0 0.0
        %1056 = vmatpush1.msra.mxu0 0.0
        %1057 = vmatprep.subr.mxu0 0.0
        %1058 = vmatpush1.msra.mxu0 0.0
        %1059 = vmatprep.subr.mxu0 0.0
        %1060 = vmatpush1.msra.mxu0 0.0
        %1061 = vmatprep.subr.mxu0 0.0
        %1062 = vmatpush1.msra.mxu0 0.0
        %1063 = vmatprep.subr.mxu0 0.0
        %1064 = vmatpush1.msra.mxu0 0.0
        %1065 = vmatprep.subr.mxu0 0.0
        %1066 = vmatpush1.msra.mxu0 0.0
        %1067 = vmatprep.subr.mxu0 0.0
        %1068 = vmatpush1.msra.mxu0 0.0
        %1069 = vmatprep.subr.mxu0 0.0
        %1070 = vmatpush1.msra.mxu0 0.0
        %1071 = vmatprep.subr.mxu0 0.0
        %1072 = vmatpush1.msra.mxu0 0.0
        %1073 = vmatprep.subr.mxu0 0.0
        %1074 = vmatpush1.msra.mxu0 0.0
        %1075 = vmatprep.mubr.f32.mxu0 0.0
        %1076 = vmatmul.mubr.f32.gmra.mrb[0].mxu0 %v1009
        %v1077 = vpop.f32.mrb[0].mxu0
        %v1078 = vadd.f32 0.0, %v1077
        %v1079 = vpop.f32.mrb[0].mxu0
        %1080 = vdwg.mxu0
        %s1081 = scalar_lea.vmem %s578, 16 [#allocation5]
        %v1082 = vld [vmem:[%s1081] sm:$0xff]
        %s1083 = scalar_lea.vmem %s596, 32 [#allocation8]
        %v1084 = vld [vmem:[%s1083] sm:$0xff]
        %v1085 = vld [vmem:[%s1083 + $0x8] sm:$0xff]
        %v1087 = vsel %vm697, %v1082, 0
        %1089 = vmatprep.subr.mxu0 0.0
        %1090 = vmatpush1.msra.mxu0 %v1084
        %1091 = vmatprep.subr.mxu0 0.0
        %1092 = vmatpush1.msra.mxu0 %v1085
        %1093 = vmatprep.subr.mxu0 0.0
        %1094 = vmatpush1.msra.mxu0 0.0
        %1095 = vmatprep.subr.mxu0 0.0
        %1096 = vmatpush1.msra.mxu0 0.0
        %1097 = vmatprep.subr.mxu0 0.0
        %1098 = vmatpush1.msra.mxu0 0.0
        %1099 = vmatprep.subr.mxu0 0.0
        %1100 = vmatpush1.msra.mxu0 0.0
        %1101 = vmatprep.subr.mxu0 0.0
        %1102 = vmatpush1.msra.mxu0 0.0
        %1103 = vmatprep.subr.mxu0 0.0
        %1104 = vmatpush1.msra.mxu0 0.0
        %1105 = vmatprep.subr.mxu0 0.0
        %1106 = vmatpush1.msra.mxu0 0.0
        %1107 = vmatprep.subr.mxu0 0.0
        %1108 = vmatpush1.msra.mxu0 0.0
        %1109 = vmatprep.subr.mxu0 0.0
        %1110 = vmatpush1.msra.mxu0 0.0
        %1111 = vmatprep.subr.mxu0 0.0
        %1112 = vmatpush1.msra.mxu0 0.0
        %1113 = vmatprep.subr.mxu0 0.0
        %1114 = vmatpush1.msra.mxu0 0.0
        %1115 = vmatprep.subr.mxu0 0.0
        %1116 = vmatpush1.msra.mxu0 0.0
        %1117 = vmatprep.subr.mxu0 0.0
        %1118 = vmatpush1.msra.mxu0 0.0
        %1119 = vmatprep.subr.mxu0 0.0
        %1120 = vmatpush1.msra.mxu0 0.0
        %1121 = vmatprep.subr.mxu0 0.0
        %1122 = vmatpush1.msra.mxu0 0.0
        %1123 = vmatprep.subr.mxu0 0.0
        %1124 = vmatpush1.msra.mxu0 0.0
        %1125 = vmatprep.subr.mxu0 0.0
        %1126 = vmatpush1.msra.mxu0 0.0
        %1127 = vmatprep.subr.mxu0 0.0
        %1128 = vmatpush1.msra.mxu0 0.0
        %1129 = vmatprep.subr.mxu0 0.0
        %1130 = vmatpush1.msra.mxu0 0.0
        %1131 = vmatprep.subr.mxu0 0.0
        %1132 = vmatpush1.msra.mxu0 0.0
        %1133 = vmatprep.subr.mxu0 0.0
        %1134 = vmatpush1.msra.mxu0 0.0
        %1135 = vmatprep.subr.mxu0 0.0
        %1136 = vmatpush1.msra.mxu0 0.0
        %1137 = vmatprep.subr.mxu0 0.0
        %1138 = vmatpush1.msra.mxu0 0.0
        %1139 = vmatprep.subr.mxu0 0.0
        %1140 = vmatpush1.msra.mxu0 0.0
        %1141 = vmatprep.subr.mxu0 0.0
        %1142 = vmatpush1.msra.mxu0 0.0
        %1143 = vmatprep.subr.mxu0 0.0
        %1144 = vmatpush1.msra.mxu0 0.0
        %1145 = vmatprep.subr.mxu0 0.0
        %1146 = vmatpush1.msra.mxu0 0.0
        %1147 = vmatprep.subr.mxu0 0.0
        %1148 = vmatpush1.msra.mxu0 0.0
        %1149 = vmatprep.subr.mxu0 0.0
        %1150 = vmatpush1.msra.mxu0 0.0
        %1151 = vmatprep.subr.mxu0 0.0
        %1152 = vmatpush1.msra.mxu0 0.0
        %1153 = vmatprep.mubr.f32.mxu0 0.0
        %1154 = vmatmul.mubr.f32.gmra.mrb[0].mxu0 %v1087
        %v1155 = vpop.f32.mrb[0].mxu0
        %v1156 = vadd.f32 0.0, %v1155
        %v1157 = vpop.f32.mrb[0].mxu0
        %1158 = vdwg.mxu0
        %s1159 = scalar_lea.vmem %s569, 24 [#allocation2]
        %v1160 = vld [vmem:[%s1159] sm:$0xff]
        %s1161 = scalar_lea.vmem %s587, 48 [#allocation7]
        %v1162 = vld [vmem:[%s1161] sm:$0xff]
        %v1163 = vld [vmem:[%s1161 + $0x8] sm:$0xff]
        %v1165 = vsel %vm697, %v1160, 0
        %1167 = vmatprep.subr.mxu0 0.0
        %1168 = vmatpush1.msra.mxu0 %v1162
        %1169 = vmatprep.subr.mxu0 0.0
        %1170 = vmatpush1.msra.mxu0 %v1163
        %1171 = vmatprep.subr.mxu0 0.0
        %1172 = vmatpush1.msra.mxu0 0.0
        %1173 = vmatprep.subr.mxu0 0.0
        %1174 = vmatpush1.msra.mxu0 0.0
        %1175 = vmatprep.subr.mxu0 0.0
        %1176 = vmatpush1.msra.mxu0 0.0
        %1177 = vmatprep.subr.mxu0 0.0
        %1178 = vmatpush1.msra.mxu0 0.0
        %1179 = vmatprep.subr.mxu0 0.0
        %1180 = vmatpush1.msra.mxu0 0.0
        %1181 = vmatprep.subr.mxu0 0.0
        %1182 = vmatpush1.msra.mxu0 0.0
        %1183 = vmatprep.subr.mxu0 0.0
        %1184 = vmatpush1.msra.mxu0 0.0
        %1185 = vmatprep.subr.mxu0 0.0
        %1186 = vmatpush1.msra.mxu0 0.0
        %1187 = vmatprep.subr.mxu0 0.0
        %1188 = vmatpush1.msra.mxu0 0.0
        %1189 = vmatprep.subr.mxu0 0.0
        %1190 = vmatpush1.msra.mxu0 0.0
        %1191 = vmatprep.subr.mxu0 0.0
        %1192 = vmatpush1.msra.mxu0 0.0
        %1193 = vmatprep.subr.mxu0 0.0
        %1194 = vmatpush1.msra.mxu0 0.0
        %1195 = vmatprep.subr.mxu0 0.0
        %1196 = vmatpush1.msra.mxu0 0.0
        %1197 = vmatprep.subr.mxu0 0.0
        %1198 = vmatpush1.msra.mxu0 0.0
        %1199 = vmatprep.subr.mxu0 0.0
        %1200 = vmatpush1.msra.mxu0 0.0
        %1201 = vmatprep.subr.mxu0 0.0
        %1202 = vmatpush1.msra.mxu0 0.0
        %1203 = vmatprep.subr.mxu0 0.0
        %1204 = vmatpush1.msra.mxu0 0.0
        %1205 = vmatprep.subr.mxu0 0.0
        %1206 = vmatpush1.msra.mxu0 0.0
        %1207 = vmatprep.subr.mxu0 0.0
        %1208 = vmatpush1.msra.mxu0 0.0
        %1209 = vmatprep.subr.mxu0 0.0
        %1210 = vmatpush1.msra.mxu0 0.0
        %1211 = vmatprep.subr.mxu0 0.0
        %1212 = vmatpush1.msra.mxu0 0.0
        %1213 = vmatprep.subr.mxu0 0.0
        %1214 = vmatpush1.msra.mxu0 0.0
        %1215 = vmatprep.subr.mxu0 0.0
        %1216 = vmatpush1.msra.mxu0 0.0
        %1217 = vmatprep.subr.mxu0 0.0
        %1218 = vmatpush1.msra.mxu0 0.0
        %1219 = vmatprep.subr.mxu0 0.0
        %1220 = vmatpush1.msra.mxu0 0.0
        %1221 = vmatprep.subr.mxu0 0.0
        %1222 = vmatpush1.msra.mxu0 0.0
        %1223 = vmatprep.subr.mxu0 0.0
        %1224 = vmatpush1.msra.mxu0 0.0
        %1225 = vmatprep.subr.mxu0 0.0
        %1226 = vmatpush1.msra.mxu0 0.0
        %1227 = vmatprep.subr.mxu0 0.0
        %1228 = vmatpush1.msra.mxu0 0.0
        %1229 = vmatprep.subr.mxu0 0.0
        %1230 = vmatpush1.msra.mxu0 0.0
        %1231 = vmatprep.mubr.f32.mxu0 0.0
        %1232 = vmatmul.mubr.f32.gmra.mrb[0].mxu0 %v1165
        %v1233 = vpop.f32.mrb[0].mxu0
        %v1234 = vadd.f32 0.0, %v1233
        %v1235 = vpop.f32.mrb[0].mxu0
        %1236 = vdwg.mxu0
        %s1237 = scalar_lea.vmem %s578, 24 [#allocation5]
        %v1238 = vld [vmem:[%s1237] sm:$0xff]
        %s1239 = scalar_lea.vmem %s596, 48 [#allocation8]
        %v1240 = vld [vmem:[%s1239] sm:$0xff]
        %v1241 = vld [vmem:[%s1239 + $0x8] sm:$0xff]
        %v1243 = vsel %vm697, %v1238, 0
        %1245 = vmatprep.subr.mxu0 0.0
        %1246 = vmatpush1.msra.mxu0 %v1240
        %1247 = vmatprep.subr.mxu0 0.0
        %1248 = vmatpush1.msra.mxu0 %v1241
        %1249 = vmatprep.subr.mxu0 0.0
        %1250 = vmatpush1.msra.mxu0 0.0
        %1251 = vmatprep.subr.mxu0 0.0
        %1252 = vmatpush1.msra.mxu0 0.0
        %1253 = vmatprep.subr.mxu0 0.0
        %1254 = vmatpush1.msra.mxu0 0.0
        %1255 = vmatprep.subr.mxu0 0.0
        %1256 = vmatpush1.msra.mxu0 0.0
        %1257 = vmatprep.subr.mxu0 0.0
        %1258 = vmatpush1.msra.mxu0 0.0
        %1259 = vmatprep.subr.mxu0 0.0
        %1260 = vmatpush1.msra.mxu0 0.0
        %1261 = vmatprep.subr.mxu0 0.0
        %1262 = vmatpush1.msra.mxu0 0.0
        %1263 = vmatprep.subr.mxu0 0.0
        %1264 = vmatpush1.msra.mxu0 0.0
        %1265 = vmatprep.subr.mxu0 0.0
        %1266 = vmatpush1.msra.mxu0 0.0
        %1267 = vmatprep.subr.mxu0 0.0
        %1268 = vmatpush1.msra.mxu0 0.0
        %1269 = vmatprep.subr.mxu0 0.0
        %1270 = vmatpush1.msra.mxu0 0.0
        %1271 = vmatprep.subr.mxu0 0.0
        %1272 = vmatpush1.msra.mxu0 0.0
        %1273 = vmatprep.subr.mxu0 0.0
        %1274 = vmatpush1.msra.mxu0 0.0
        %1275 = vmatprep.subr.mxu0 0.0
        %1276 = vmatpush1.msra.mxu0 0.0
        %1277 = vmatprep.subr.mxu0 0.0
        %1278 = vmatpush1.msra.mxu0 0.0
        %1279 = vmatprep.subr.mxu0 0.0
        %1280 = vmatpush1.msra.mxu0 0.0
        %1281 = vmatprep.subr.mxu0 0.0
        %1282 = vmatpush1.msra.mxu0 0.0
        %1283 = vmatprep.subr.mxu0 0.0
        %1284 = vmatpush1.msra.mxu0 0.0
        %1285 = vmatprep.subr.mxu0 0.0
        %1286 = vmatpush1.msra.mxu0 0.0
        %1287 = vmatprep.subr.mxu0 0.0
        %1288 = vmatpush1.msra.mxu0 0.0
        %1289 = vmatprep.subr.mxu0 0.0
        %1290 = vmatpush1.msra.mxu0 0.0
        %1291 = vmatprep.subr.mxu0 0.0
        %1292 = vmatpush1.msra.mxu0 0.0
        %1293 = vmatprep.subr.mxu0 0.0
        %1294 = vmatpush1.msra.mxu0 0.0
        %1295 = vmatprep.subr.mxu0 0.0
        %1296 = vmatpush1.msra.mxu0 0.0
        %1297 = vmatprep.subr.mxu0 0.0
        %1298 = vmatpush1.msra.mxu0 0.0
        %1299 = vmatprep.subr.mxu0 0.0
        %1300 = vmatpush1.msra.mxu0 0.0
        %1301 = vmatprep.subr.mxu0 0.0
        %1302 = vmatpush1.msra.mxu0 0.0
        %1303 = vmatprep.subr.mxu0 0.0
        %1304 = vmatpush1.msra.mxu0 0.0
        %1305 = vmatprep.subr.mxu0 0.0
        %1306 = vmatpush1.msra.mxu0 0.0
        %1307 = vmatprep.subr.mxu0 0.0
        %1308 = vmatpush1.msra.mxu0 0.0
        %1309 = vmatprep.mubr.f32.mxu0 0.0
        %1310 = vmatmul.mubr.f32.gmra.mrb[0].mxu0 %v1243
        %v1311 = vpop.f32.mrb[0].mxu0
        %v1312 = vadd.f32 0.0, %v1311
        %v1313 = vpop.f32.mrb[0].mxu0
        %1314 = vdwg.mxu0
        %v1315 = vld [vmem:[%s605] sm:$0xff]
        %v1316 = vld [vmem:[%s605 + $0x8] sm:$0xff]
        %v1317 = vld [vmem:[%s605 + $0x10] sm:$0xff]
        %v1318 = vld [vmem:[%s605 + $0x18] sm:$0xff]
        %v1319 = vld [vmem:[#allocation11] sm:$0xff]
        %v1320 = vld [vmem:[#allocation11 + $0x8] sm:$0xff]
        %v1321 = vld [vmem:[#allocation11 + $0x10] sm:$0xff]
        %v1322 = vld [vmem:[#allocation11 + $0x18] sm:$0xff]
        %v1323 = vld [vmem:[#allocation13] sm:$0xff]
        %v1324 = vld [vmem:[#allocation13 + $0x8] sm:$0xff]
        %v1325 = vld [vmem:[#allocation13 + $0x10] sm:$0xff]
        %v1326 = vld [vmem:[#allocation13 + $0x18] sm:$0xff]
        %vm1327 = vcmask 261120
        %v1329 = vsel %vm1327, %v844, 0
        %v1332 = vsel %vm1327, %v1000, 0
        %v1335 = vsel %vm1327, %v1156, 0
        %v1338 = vsel %vm1327, %v1312, 0
        %1340 = vmatprep.subr.mxu0 0.0
        %1341 = vmatpush1.msra.mxu0 %v1323
        %1342 = vmatprep.subr.mxu0 0.0
        %1343 = vmatpush1.msra.mxu0 %v1324
        %1344 = vmatprep.subr.mxu0 0.0
        %1345 = vmatpush1.msra.mxu0 %v1325
        %1346 = vmatprep.subr.mxu0 0.0
        %1347 = vmatpush1.msra.mxu0 %v1326
        %1348 = vmatprep.subr.mxu0 0.0
        %1349 = vmatpush1.msra.mxu0 0.0
        %1350 = vmatprep.subr.mxu0 0.0
        %1351 = vmatpush1.msra.mxu0 0.0
        %1352 = vmatprep.subr.mxu0 0.0
        %1353 = vmatpush1.msra.mxu0 0.0
        %1354 = vmatprep.subr.mxu0 0.0
        %1355 = vmatpush1.msra.mxu0 0.0
        %1356 = vmatprep.subr.mxu0 0.0
        %1357 = vmatpush1.msra.mxu0 0.0
        %1358 = vmatprep.subr.mxu0 0.0
        %1359 = vmatpush1.msra.mxu0 0.0
        %1360 = vmatprep.subr.mxu0 0.0
        %1361 = vmatpush1.msra.mxu0 0.0
        %1362 = vmatprep.subr.mxu0 0.0
        %1363 = vmatpush1.msra.mxu0 0.0
        %1364 = vmatprep.subr.mxu0 0.0
        %1365 = vmatpush1.msra.mxu0 0.0
        %1366 = vmatprep.subr.mxu0 0.0
        %1367 = vmatpush1.msra.mxu0 0.0
        %1368 = vmatprep.subr.mxu0 0.0
        %1369 = vmatpush1.msra.mxu0 0.0
        %1370 = vmatprep.subr.mxu0 0.0
        %1371 = vmatpush1.msra.mxu0 0.0
        %1372 = vmatprep.subr.mxu0 0.0
        %1373 = vmatpush1.msra.mxu0 0.0
        %1374 = vmatprep.subr.mxu0 0.0
        %1375 = vmatpush1.msra.mxu0 0.0
        %1376 = vmatprep.subr.mxu0 0.0
        %1377 = vmatpush1.msra.mxu0 0.0
        %1378 = vmatprep.subr.mxu0 0.0
        %1379 = vmatpush1.msra.mxu0 0.0
        %1380 = vmatprep.subr.mxu0 0.0
        %1381 = vmatpush1.msra.mxu0 0.0
        %1382 = vmatprep.subr.mxu0 0.0
        %1383 = vmatpush1.msra.mxu0 0.0
        %1384 = vmatprep.subr.mxu0 0.0
        %1385 = vmatpush1.msra.mxu0 0.0
        %1386 = vmatprep.subr.mxu0 0.0
        %1387 = vmatpush1.msra.mxu0 0.0
        %1388 = vmatprep.subr.mxu0 0.0
        %1389 = vmatpush1.msra.mxu0 0.0
        %1390 = vmatprep.subr.mxu0 0.0
        %1391 = vmatpush1.msra.mxu0 0.0
        %1392 = vmatprep.subr.mxu0 0.0
        %1393 = vmatpush1.msra.mxu0 0.0
        %1394 = vmatprep.subr.mxu0 0.0
        %1395 = vmatpush1.msra.mxu0 0.0
        %1396 = vmatprep.subr.mxu0 0.0
        %1397 = vmatpush1.msra.mxu0 0.0
        %1398 = vmatprep.subr.mxu0 0.0
        %1399 = vmatpush1.msra.mxu0 0.0
        %1400 = vmatprep.subr.mxu0 0.0
        %1401 = vmatpush1.msra.mxu0 0.0
        %1402 = vmatprep.subr.mxu0 0.0
        %1403 = vmatpush1.msra.mxu0 0.0
        %1404 = vmatprep.mubr.f32.mxu0 0.0
        %1405 = vmatmul.mubr.f32.gmra.mrb[0].mxu0 %v1329
        %v1406 = vpop.f32.mrb[0].mxu0
        %v1407 = vadd.f32 0.0, %v1406
        %v1408 = vpop.f32.mrb[0].mxu0
        %1409 = vmatprep.mubr.f32.mxu0 0.0
        %1410 = vmatmul.mubr.f32.gmra.mrb[0].mxu0 %v1332
        %v1411 = vpop.f32.mrb[0].mxu0
        %v1412 = vadd.f32 0.0, %v1411
        %v1413 = vpop.f32.mrb[0].mxu0
        %1414 = vmatprep.mubr.f32.mxu0 0.0
        %1415 = vmatmul.mubr.f32.gmra.mrb[0].mxu0 %v1335
        %v1416 = vpop.f32.mrb[0].mxu0
        %v1417 = vadd.f32 0.0, %v1416
        %v1418 = vpop.f32.mrb[0].mxu0
        %1419 = vmatprep.mubr.f32.mxu0 0.0
        %1420 = vmatmul.mubr.f32.gmra.mrb[0].mxu0 %v1338
        %v1421 = vpop.f32.mrb[0].mxu0
        %v1422 = vadd.f32 0.0, %v1421
        %v1423 = vpop.f32.mrb[0].mxu0
        %1424 = vdwg.mxu0
        %v1426 = vsel %vm1327, %v768, 0
        %v1429 = vsel %vm1327, %v922, 0
        %v1432 = vsel %vm1327, %v1078, 0
        %v1435 = vsel %vm1327, %v1234, 0
        %1437 = vmatprep.subr.mxu0 0.0
        %1438 = vmatpush1.msra.mxu0 %v1319
        %1439 = vmatprep.subr.mxu0 0.0
        %1440 = vmatpush1.msra.mxu0 %v1320
        %1441 = vmatprep.subr.mxu0 0.0
        %1442 = vmatpush1.msra.mxu0 %v1321
        %1443 = vmatprep.subr.mxu0 0.0
        %1444 = vmatpush1.msra.mxu0 %v1322
        %1445 = vmatprep.subr.mxu0 0.0
        %1446 = vmatpush1.msra.mxu0 0.0
        %1447 = vmatprep.subr.mxu0 0.0
        %1448 = vmatpush1.msra.mxu0 0.0
        %1449 = vmatprep.subr.mxu0 0.0
        %1450 = vmatpush1.msra.mxu0 0.0
        %1451 = vmatprep.subr.mxu0 0.0
        %1452 = vmatpush1.msra.mxu0 0.0
        %1453 = vmatprep.subr.mxu0 0.0
        %1454 = vmatpush1.msra.mxu0 0.0
        %1455 = vmatprep.subr.mxu0 0.0
        %1456 = vmatpush1.msra.mxu0 0.0
        %1457 = vmatprep.subr.mxu0 0.0
        %1458 = vmatpush1.msra.mxu0 0.0
        %1459 = vmatprep.subr.mxu0 0.0
        %1460 = vmatpush1.msra.mxu0 0.0
        %1461 = vmatprep.subr.mxu0 0.0
        %1462 = vmatpush1.msra.mxu0 0.0
        %1463 = vmatprep.subr.mxu0 0.0
        %1464 = vmatpush1.msra.mxu0 0.0
        %1465 = vmatprep.subr.mxu0 0.0
        %1466 = vmatpush1.msra.mxu0 0.0
        %1467 = vmatprep.subr.mxu0 0.0
        %1468 = vmatpush1.msra.mxu0 0.0
        %1469 = vmatprep.subr.mxu0 0.0
        %1470 = vmatpush1.msra.mxu0 0.0
        %1471 = vmatprep.subr.mxu0 0.0
        %1472 = vmatpush1.msra.mxu0 0.0
        %1473 = vmatprep.subr.mxu0 0.0
        %1474 = vmatpush1.msra.mxu0 0.0
        %1475 = vmatprep.subr.mxu0 0.0
        %1476 = vmatpush1.msra.mxu0 0.0
        %1477 = vmatprep.subr.mxu0 0.0
        %1478 = vmatpush1.msra.mxu0 0.0
        %1479 = vmatprep.subr.mxu0 0.0
        %1480 = vmatpush1.msra.mxu0 0.0
        %1481 = vmatprep.subr.mxu0 0.0
        %1482 = vmatpush1.msra.mxu0 0.0
        %1483 = vmatprep.subr.mxu0 0.0
        %1484 = vmatpush1.msra.mxu0 0.0
        %1485 = vmatprep.subr.mxu0 0.0
        %1486 = vmatpush1.msra.mxu0 0.0
        %1487 = vmatprep.subr.mxu0 0.0
        %1488 = vmatpush1.msra.mxu0 0.0
        %1489 = vmatprep.subr.mxu0 0.0
        %1490 = vmatpush1.msra.mxu0 0.0
        %1491 = vmatprep.subr.mxu0 0.0
        %1492 = vmatpush1.msra.mxu0 0.0
        %1493 = vmatprep.subr.mxu0 0.0
        %1494 = vmatpush1.msra.mxu0 0.0
        %1495 = vmatprep.subr.mxu0 0.0
        %1496 = vmatpush1.msra.mxu0 0.0
        %1497 = vmatprep.subr.mxu0 0.0
        %1498 = vmatpush1.msra.mxu0 0.0
        %1499 = vmatprep.subr.mxu0 0.0
        %1500 = vmatpush1.msra.mxu0 0.0
        %1501 = vmatprep.mubr.f32.mxu0 0.0
        %1502 = vmatmul.mubr.f32.gmra.mrb[0].mxu0 %v1426
        %v1503 = vpop.f32.mrb[0].mxu0
        %v1504 = vadd.f32 %v1407, %v1503
        %v1505 = vpop.f32.mrb[0].mxu0
        %1506 = vmatprep.mubr.f32.mxu0 0.0
        %1507 = vmatmul.mubr.f32.gmra.mrb[0].mxu0 %v1429
        %v1508 = vpop.f32.mrb[0].mxu0
        %v1509 = vadd.f32 %v1412, %v1508
        %v1510 = vpop.f32.mrb[0].mxu0
        %1511 = vmatprep.mubr.f32.mxu0 0.0
        %1512 = vmatmul.mubr.f32.gmra.mrb[0].mxu0 %v1432
        %v1513 = vpop.f32.mrb[0].mxu0
        %v1514 = vadd.f32 %v1417, %v1513
        %v1515 = vpop.f32.mrb[0].mxu0
        %1516 = vmatprep.mubr.f32.mxu0 0.0
        %1517 = vmatmul.mubr.f32.gmra.mrb[0].mxu0 %v1435
        %v1518 = vpop.f32.mrb[0].mxu0
        %v1519 = vadd.f32 %v1422, %v1518
        %v1520 = vpop.f32.mrb[0].mxu0
        %1521 = vdwg.mxu0
        %v1522 = vld [vmem:[#allocation14] sm:$0xff]
        %v1523 = vld [vmem:[#allocation14 + $0x8] sm:$0xff]
        %v1524 = vld [vmem:[#allocation14 + $0x10] sm:$0xff]
        %v1525 = vld [vmem:[#allocation14 + $0x18] sm:$0xff]
        %v1527 = vsel %vm1327, %v1315, 0
        %v1530 = vsel %vm1327, %v1316, 0
        %v1533 = vsel %vm1327, %v1317, 0
        %v1536 = vsel %vm1327, %v1318, 0
        %1538 = vmatprep.subr.mxu0 0.0
        %1539 = vmatpush1.msra.mxu0 %v1522
        %1540 = vmatprep.subr.mxu0 0.0
        %1541 = vmatpush1.msra.mxu0 %v1523
        %1542 = vmatprep.subr.mxu0 0.0
        %1543 = vmatpush1.msra.mxu0 %v1524
        %1544 = vmatprep.subr.mxu0 0.0
        %1545 = vmatpush1.msra.mxu0 %v1525
        %1546 = vmatprep.subr.mxu0 0.0
        %1547 = vmatpush1.msra.mxu0 0.0
        %1548 = vmatprep.subr.mxu0 0.0
        %1549 = vmatpush1.msra.mxu0 0.0
        %1550 = vmatprep.subr.mxu0 0.0
        %1551 = vmatpush1.msra.mxu0 0.0
        %1552 = vmatprep.subr.mxu0 0.0
        %1553 = vmatpush1.msra.mxu0 0.0
        %1554 = vmatprep.subr.mxu0 0.0
        %1555 = vmatpush1.msra.mxu0 0.0
        %1556 = vmatprep.subr.mxu0 0.0
        %1557 = vmatpush1.msra.mxu0 0.0
        %1558 = vmatprep.subr.mxu0 0.0
        %1559 = vmatpush1.msra.mxu0 0.0
        %1560 = vmatprep.subr.mxu0 0.0
        %1561 = vmatpush1.msra.mxu0 0.0
        %1562 = vmatprep.subr.mxu0 0.0
        %1563 = vmatpush1.msra.mxu0 0.0
        %1564 = vmatprep.subr.mxu0 0.0
        %1565 = vmatpush1.msra.mxu0 0.0
        %1566 = vmatprep.subr.mxu0 0.0
        %1567 = vmatpush1.msra.mxu0 0.0
        %1568 = vmatprep.subr.mxu0 0.0
        %1569 = vmatpush1.msra.mxu0 0.0
        %1570 = vmatprep.subr.mxu0 0.0
        %1571 = vmatpush1.msra.mxu0 0.0
        %1572 = vmatprep.subr.mxu0 0.0
        %1573 = vmatpush1.msra.mxu0 0.0
        %1574 = vmatprep.subr.mxu0 0.0
        %1575 = vmatpush1.msra.mxu0 0.0
        %1576 = vmatprep.subr.mxu0 0.0
        %1577 = vmatpush1.msra.mxu0 0.0
        %1578 = vmatprep.subr.mxu0 0.0
        %1579 = vmatpush1.msra.mxu0 0.0
        %1580 = vmatprep.subr.mxu0 0.0
        %1581 = vmatpush1.msra.mxu0 0.0
        %1582 = vmatprep.subr.mxu0 0.0
        %1583 = vmatpush1.msra.mxu0 0.0
        %1584 = vmatprep.subr.mxu0 0.0
        %1585 = vmatpush1.msra.mxu0 0.0
        %1586 = vmatprep.subr.mxu0 0.0
        %1587 = vmatpush1.msra.mxu0 0.0
        %1588 = vmatprep.subr.mxu0 0.0
        %1589 = vmatpush1.msra.mxu0 0.0
        %1590 = vmatprep.subr.mxu0 0.0
        %1591 = vmatpush1.msra.mxu0 0.0
        %1592 = vmatprep.subr.mxu0 0.0
        %1593 = vmatpush1.msra.mxu0 0.0
        %1594 = vmatprep.subr.mxu0 0.0
        %1595 = vmatpush1.msra.mxu0 0.0
        %1596 = vmatprep.subr.mxu0 0.0
        %1597 = vmatpush1.msra.mxu0 0.0
        %1598 = vmatprep.subr.mxu0 0.0
        %1599 = vmatpush1.msra.mxu0 0.0
        %1600 = vmatprep.subr.mxu0 0.0
        %1601 = vmatpush1.msra.mxu0 0.0
        %1602 = vmatprep.mubr.f32.mxu0 0.0
        %1603 = vmatmul.mubr.f32.gmra.mrb[0].mxu0 %v1527
        %v1604 = vpop.f32.mrb[0].mxu0
        %v1605 = vadd.f32 0.0, %v1604
        %v1606 = vpop.f32.mrb[0].mxu0
        %1607 = vmatprep.mubr.f32.mxu0 0.0
        %1608 = vmatmul.mubr.f32.gmra.mrb[0].mxu0 %v1530
        %v1609 = vpop.f32.mrb[0].mxu0
        %v1610 = vadd.f32 0.0, %v1609
        %v1611 = vpop.f32.mrb[0].mxu0
        %1612 = vmatprep.mubr.f32.mxu0 0.0
        %1613 = vmatmul.mubr.f32.gmra.mrb[0].mxu0 %v1533
        %v1614 = vpop.f32.mrb[0].mxu0
        %v1615 = vadd.f32 0.0, %v1614
        %v1616 = vpop.f32.mrb[0].mxu0
        %1617 = vmatprep.mubr.f32.mxu0 0.0
        %1618 = vmatmul.mubr.f32.gmra.mrb[0].mxu0 %v1536
        %v1619 = vpop.f32.mrb[0].mxu0
        %v1620 = vadd.f32 0.0, %v1619
        %v1621 = vpop.f32.mrb[0].mxu0
        %1622 = vdwg.mxu0
        %v1623 = vadd.f32 %v1504, %v1605
        %v1624 = vadd.f32 %v1509, %v1610
        %v1625 = vadd.f32 %v1514, %v1615
        %v1626 = vadd.f32 %v1519, %v1620
        %v1627 = vld [vmem:[%s8] sm:$0x1]
        %v1629 = vlaneseq
        %v1630 = vshrl.u32 %v1629, 7
        %v1631 = vsub.s32 0, %v1630
        %v1632 = vrot.slane %v1627, %v1631
        %v1634 = vadd.f32 %v1623, %v1632
        %v1635 = vadd.f32 %v1624, %v1632
        %v1636 = vadd.f32 %v1625, %v1632
        %v1637 = vadd.f32 %v1626, %v1632
        %v1638 = vxor.u32 %v1634, 2147483648
        %v1639 = vxor.u32 %v1635, 2147483648
        %v1640 = vxor.u32 %v1636, 2147483648
        %v1641 = vxor.u32 %v1637, 2147483648
        %v1642 = vmul.f32 %v1638, 1.442695
        %v1643 = vpow.pop %v1642
        %v1644 = vmul.f32 %v1639, 1.442695
        %v1645 = vpow.pop %v1644
        %v1646 = vmul.f32 %v1640, 1.442695
        %v1647 = vpow.pop %v1646
        %v1648 = vmul.f32 %v1641, 1.442695
        %v1649 = vpow.pop %v1648
        %v1650 = vadd.f32 %v1643, 1.0
        %v1651 = vadd.f32 %v1645, 1.0
        %v1652 = vadd.f32 %v1647, 1.0
        %v1653 = vadd.f32 %v1649, 1.0
        %v1654 = vrcp.pop %v1650
        %v1655 = vmul.f32 1.0, %v1654
        %v1656 = vrcp.pop %v1651
        %v1657 = vmul.f32 1.0, %v1656
        %v1658 = vrcp.pop %v1652
        %v1659 = vmul.f32 1.0, %v1658
        %v1660 = vrcp.pop %v1653
        %v1661 = vmul.f32 1.0, %v1660
        %v1662 = vld [vmem:[%s9] sm:$0xff]
        %v1663 = vld [vmem:[%s9 + $0x8] sm:$0xff]
        %v1664 = vld [vmem:[%s9 + $0x10] sm:$0xff]
        %v1665 = vld [vmem:[%s9 + $0x18] sm:$0xff]
        %v1666 = vld [vmem:[#allocation16] sm:$0xff]
        %v1667 = vld [vmem:[#allocation16 + $0x8] sm:$0xff]
        %v1668 = vld [vmem:[#allocation16 + $0x10] sm:$0xff]
        %v1669 = vld [vmem:[#allocation16 + $0x18] sm:$0xff]
        %1670 = vmatprep.subr.mxu0 0.0
        %1671 = vmatpush1.msra.mxu0 %v1666
        %1672 = vmatprep.subr.mxu0 0.0
        %1673 = vmatpush1.msra.mxu0 %v1667
        %1674 = vmatprep.subr.mxu0 0.0
        %1675 = vmatpush1.msra.mxu0 %v1668
        %1676 = vmatprep.subr.mxu0 0.0
        %1677 = vmatpush1.msra.mxu0 %v1669
        %1678 = vmatprep.subr.mxu0 0.0
        %1679 = vmatpush1.msra.mxu0 0.0
        %1680 = vmatprep.subr.mxu0 0.0
        %1681 = vmatpush1.msra.mxu0 0.0
        %1682 = vmatprep.subr.mxu0 0.0
        %1683 = vmatpush1.msra.mxu0 0.0
        %1684 = vmatprep.subr.mxu0 0.0
        %1685 = vmatpush1.msra.mxu0 0.0
        %1686 = vmatprep.subr.mxu0 0.0
        %1687 = vmatpush1.msra.mxu0 0.0
        %1688 = vmatprep.subr.mxu0 0.0
        %1689 = vmatpush1.msra.mxu0 0.0
        %1690 = vmatprep.subr.mxu0 0.0
        %1691 = vmatpush1.msra.mxu0 0.0
        %1692 = vmatprep.subr.mxu0 0.0
        %1693 = vmatpush1.msra.mxu0 0.0
        %1694 = vmatprep.subr.mxu0 0.0
        %1695 = vmatpush1.msra.mxu0 0.0
        %1696 = vmatprep.subr.mxu0 0.0
        %1697 = vmatpush1.msra.mxu0 0.0
        %1698 = vmatprep.subr.mxu0 0.0
        %1699 = vmatpush1.msra.mxu0 0.0
        %1700 = vmatprep.subr.mxu0 0.0
        %1701 = vmatpush1.msra.mxu0 0.0
        %1702 = vmatprep.subr.mxu0 0.0
        %1703 = vmatpush1.msra.mxu0 0.0
        %1704 = vmatprep.subr.mxu0 0.0
        %1705 = vmatpush1.msra.mxu0 0.0
        %1706 = vmatprep.subr.mxu0 0.0
        %1707 = vmatpush1.msra.mxu0 0.0
        %1708 = vmatprep.subr.mxu0 0.0
        %1709 = vmatpush1.msra.mxu0 0.0
        %1710 = vmatprep.subr.mxu0 0.0
        %1711 = vmatpush1.msra.mxu0 0.0
        %1712 = vmatprep.subr.mxu0 0.0
        %1713 = vmatpush1.msra.mxu0 0.0
        %1714 = vmatprep.subr.mxu0 0.0
        %1715 = vmatpush1.msra.mxu0 0.0
        %1716 = vmatprep.subr.mxu0 0.0
        %1717 = vmatpush1.msra.mxu0 0.0
        %1718 = vmatprep.subr.mxu0 0.0
        %1719 = vmatpush1.msra.mxu0 0.0
        %1720 = vmatprep.subr.mxu0 0.0
        %1721 = vmatpush1.msra.mxu0 0.0
        %1722 = vmatprep.subr.mxu0 0.0
        %1723 = vmatpush1.msra.mxu0 0.0
        %1724 = vmatprep.subr.mxu0 0.0
        %1725 = vmatpush1.msra.mxu0 0.0
        %1726 = vmatprep.subr.mxu0 0.0
        %1727 = vmatpush1.msra.mxu0 0.0
        %1728 = vmatprep.subr.mxu0 0.0
        %1729 = vmatpush1.msra.mxu0 0.0
        %1730 = vmatprep.subr.mxu0 0.0
        %1731 = vmatpush1.msra.mxu0 0.0
        %1732 = vmatprep.subr.mxu0 0.0
        %1733 = vmatpush1.msra.mxu0 0.0
        %1734 = vmatprep.mubr.f32.mxu0 0.0
        %1735 = vmatmul.mubr.f32.gmra.mrb[0].mxu0 %v1329
        %v1736 = vpop.f32.mrb[0].mxu0
        %v1737 = vadd.f32 0.0, %v1736
        %v1738 = vpop.f32.mrb[0].mxu0
        %1739 = vmatprep.mubr.f32.mxu0 0.0
        %1740 = vmatmul.mubr.f32.gmra.mrb[0].mxu0 %v1332
        %v1741 = vpop.f32.mrb[0].mxu0
        %v1742 = vadd.f32 0.0, %v1741
        %v1743 = vpop.f32.mrb[0].mxu0
        %1744 = vmatprep.mubr.f32.mxu0 0.0
        %1745 = vmatmul.mubr.f32.gmra.mrb[0].mxu0 %v1335
        %v1746 = vpop.f32.mrb[0].mxu0
        %v1747 = vadd.f32 0.0, %v1746
        %v1748 = vpop.f32.mrb[0].mxu0
        %1749 = vmatprep.mubr.f32.mxu0 0.0
        %1750 = vmatmul.mubr.f32.gmra.mrb[0].mxu0 %v1338
        %v1751 = vpop.f32.mrb[0].mxu0
        %v1752 = vadd.f32 0.0, %v1751
        %v1753 = vpop.f32.mrb[0].mxu0
        %1754 = vdwg.mxu0
        %1755 = vmatprep.subr.mxu0 0.0
        %1756 = vmatpush1.msra.mxu0 %v1662
        %1757 = vmatprep.subr.mxu0 0.0
        %1758 = vmatpush1.msra.mxu0 %v1663
        %1759 = vmatprep.subr.mxu0 0.0
        %1760 = vmatpush1.msra.mxu0 %v1664
        %1761 = vmatprep.subr.mxu0 0.0
        %1762 = vmatpush1.msra.mxu0 %v1665
        %1763 = vmatprep.subr.mxu0 0.0
        %1764 = vmatpush1.msra.mxu0 0.0
        %1765 = vmatprep.subr.mxu0 0.0
        %1766 = vmatpush1.msra.mxu0 0.0
        %1767 = vmatprep.subr.mxu0 0.0
        %1768 = vmatpush1.msra.mxu0 0.0
        %1769 = vmatprep.subr.mxu0 0.0
        %1770 = vmatpush1.msra.mxu0 0.0
        %1771 = vmatprep.subr.mxu0 0.0
        %1772 = vmatpush1.msra.mxu0 0.0
        %1773 = vmatprep.subr.mxu0 0.0
        %1774 = vmatpush1.msra.mxu0 0.0
        %1775 = vmatprep.subr.mxu0 0.0
        %1776 = vmatpush1.msra.mxu0 0.0
        %1777 = vmatprep.subr.mxu0 0.0
        %1778 = vmatpush1.msra.mxu0 0.0
        %1779 = vmatprep.subr.mxu0 0.0
        %1780 = vmatpush1.msra.mxu0 0.0
        %1781 = vmatprep.subr.mxu0 0.0
        %1782 = vmatpush1.msra.mxu0 0.0
        %1783 = vmatprep.subr.mxu0 0.0
        %1784 = vmatpush1.msra.mxu0 0.0
        %1785 = vmatprep.subr.mxu0 0.0
        %1786 = vmatpush1.msra.mxu0 0.0
        %1787 = vmatprep.subr.mxu0 0.0
        %1788 = vmatpush1.msra.mxu0 0.0
        %1789 = vmatprep.subr.mxu0 0.0
        %1790 = vmatpush1.msra.mxu0 0.0
        %1791 = vmatprep.subr.mxu0 0.0
        %1792 = vmatpush1.msra.mxu0 0.0
        %1793 = vmatprep.subr.mxu0 0.0
        %1794 = vmatpush1.msra.mxu0 0.0
        %1795 = vmatprep.subr.mxu0 0.0
        %1796 = vmatpush1.msra.mxu0 0.0
        %1797 = vmatprep.subr.mxu0 0.0
        %1798 = vmatpush1.msra.mxu0 0.0
        %1799 = vmatprep.subr.mxu0 0.0
        %1800 = vmatpush1.msra.mxu0 0.0
        %1801 = vmatprep.subr.mxu0 0.0
        %1802 = vmatpush1.msra.mxu0 0.0
        %1803 = vmatprep.subr.mxu0 0.0
        %1804 = vmatpush1.msra.mxu0 0.0
        %1805 = vmatprep.subr.mxu0 0.0
        %1806 = vmatpush1.msra.mxu0 0.0
        %1807 = vmatprep.subr.mxu0 0.0
        %1808 = vmatpush1.msra.mxu0 0.0
        %1809 = vmatprep.subr.mxu0 0.0
        %1810 = vmatpush1.msra.mxu0 0.0
        %1811 = vmatprep.subr.mxu0 0.0
        %1812 = vmatpush1.msra.mxu0 0.0
        %1813 = vmatprep.subr.mxu0 0.0
        %1814 = vmatpush1.msra.mxu0 0.0
        %1815 = vmatprep.subr.mxu0 0.0
        %1816 = vmatpush1.msra.mxu0 0.0
        %1817 = vmatprep.subr.mxu0 0.0
        %1818 = vmatpush1.msra.mxu0 0.0
        %1819 = vmatprep.mubr.f32.mxu0 0.0
        %1820 = vmatmul.mubr.f32.gmra.mrb[0].mxu0 %v1426
        %v1821 = vpop.f32.mrb[0].mxu0
        %v1822 = vadd.f32 %v1737, %v1821
        %v1823 = vpop.f32.mrb[0].mxu0
        %1824 = vmatprep.mubr.f32.mxu0 0.0
        %1825 = vmatmul.mubr.f32.gmra.mrb[0].mxu0 %v1429
        %v1826 = vpop.f32.mrb[0].mxu0
        %v1827 = vadd.f32 %v1742, %v1826
        %v1828 = vpop.f32.mrb[0].mxu0
        %1829 = vmatprep.mubr.f32.mxu0 0.0
        %1830 = vmatmul.mubr.f32.gmra.mrb[0].mxu0 %v1432
        %v1831 = vpop.f32.mrb[0].mxu0
        %v1832 = vadd.f32 %v1747, %v1831
        %v1833 = vpop.f32.mrb[0].mxu0
        %1834 = vmatprep.mubr.f32.mxu0 0.0
        %1835 = vmatmul.mubr.f32.gmra.mrb[0].mxu0 %v1435
        %v1836 = vpop.f32.mrb[0].mxu0
        %v1837 = vadd.f32 %v1752, %v1836
        %v1838 = vpop.f32.mrb[0].mxu0
        %1839 = vdwg.mxu0
        %v1840 = vmul.f32 %v1655, %v1315
        %v1841 = vmul.f32 %v1657, %v1316
        %v1842 = vmul.f32 %v1659, %v1317
        %v1843 = vmul.f32 %v1661, %v1318
        %v1844 = vld [vmem:[#allocation17] sm:$0xff]
        %v1845 = vld [vmem:[#allocation17 + $0x8] sm:$0xff]
        %v1846 = vld [vmem:[#allocation17 + $0x10] sm:$0xff]
        %v1847 = vld [vmem:[#allocation17 + $0x18] sm:$0xff]
        %v1849 = vsel %vm1327, %v1840, 0
        %v1852 = vsel %vm1327, %v1841, 0
        %v1855 = vsel %vm1327, %v1842, 0
        %v1858 = vsel %vm1327, %v1843, 0
        %1860 = vmatprep.subr.mxu0 0.0
        %1861 = vmatpush1.msra.mxu0 %v1844
        %1862 = vmatprep.subr.mxu0 0.0
        %1863 = vmatpush1.msra.mxu0 %v1845
        %1864 = vmatprep.subr.mxu0 0.0
        %1865 = vmatpush1.msra.mxu0 %v1846
        %1866 = vmatprep.subr.mxu0 0.0
        %1867 = vmatpush1.msra.mxu0 %v1847
        %1868 = vmatprep.subr.mxu0 0.0
        %1869 = vmatpush1.msra.mxu0 0.0
        %1870 = vmatprep.subr.mxu0 0.0
        %1871 = vmatpush1.msra.mxu0 0.0
        %1872 = vmatprep.subr.mxu0 0.0
        %1873 = vmatpush1.msra.mxu0 0.0
        %1874 = vmatprep.subr.mxu0 0.0
        %1875 = vmatpush1.msra.mxu0 0.0
        %1876 = vmatprep.subr.mxu0 0.0
        %1877 = vmatpush1.msra.mxu0 0.0
        %1878 = vmatprep.subr.mxu0 0.0
        %1879 = vmatpush1.msra.mxu0 0.0
        %1880 = vmatprep.subr.mxu0 0.0
        %1881 = vmatpush1.msra.mxu0 0.0
        %1882 = vmatprep.subr.mxu0 0.0
        %1883 = vmatpush1.msra.mxu0 0.0
        %1884 = vmatprep.subr.mxu0 0.0
        %1885 = vmatpush1.msra.mxu0 0.0
        %1886 = vmatprep.subr.mxu0 0.0
        %1887 = vmatpush1.msra.mxu0 0.0
        %1888 = vmatprep.subr.mxu0 0.0
        %1889 = vmatpush1.msra.mxu0 0.0
        %1890 = vmatprep.subr.mxu0 0.0
        %1891 = vmatpush1.msra.mxu0 0.0
        %1892 = vmatprep.subr.mxu0 0.0
        %1893 = vmatpush1.msra.mxu0 0.0
        %1894 = vmatprep.subr.mxu0 0.0
        %1895 = vmatpush1.msra.mxu0 0.0
        %1896 = vmatprep.subr.mxu0 0.0
        %1897 = vmatpush1.msra.mxu0 0.0
        %1898 = vmatprep.subr.mxu0 0.0
        %1899 = vmatpush1.msra.mxu0 0.0
        %1900 = vmatprep.subr.mxu0 0.0
        %1901 = vmatpush1.msra.mxu0 0.0
        %1902 = vmatprep.subr.mxu0 0.0
        %1903 = vmatpush1.msra.mxu0 0.0
        %1904 = vmatprep.subr.mxu0 0.0
        %1905 = vmatpush1.msra.mxu0 0.0
        %1906 = vmatprep.subr.mxu0 0.0
        %1907 = vmatpush1.msra.mxu0 0.0
        %1908 = vmatprep.subr.mxu0 0.0
        %1909 = vmatpush1.msra.mxu0 0.0
        %1910 = vmatprep.subr.mxu0 0.0
        %1911 = vmatpush1.msra.mxu0 0.0
        %1912 = vmatprep.subr.mxu0 0.0
        %1913 = vmatpush1.msra.mxu0 0.0
        %1914 = vmatprep.subr.mxu0 0.0
        %1915 = vmatpush1.msra.mxu0 0.0
        %1916 = vmatprep.subr.mxu0 0.0
        %1917 = vmatpush1.msra.mxu0 0.0
        %1918 = vmatprep.subr.mxu0 0.0
        %1919 = vmatpush1.msra.mxu0 0.0
        %1920 = vmatprep.subr.mxu0 0.0
        %1921 = vmatpush1.msra.mxu0 0.0
        %1922 = vmatprep.subr.mxu0 0.0
        %1923 = vmatpush1.msra.mxu0 0.0
        %1924 = vmatprep.mubr.f32.mxu0 0.0
        %1925 = vmatmul.mubr.f32.gmra.mrb[0].mxu0 %v1849
        %v1926 = vpop.f32.mrb[0].mxu0
        %v1927 = vadd.f32 0.0, %v1926
        %v1928 = vpop.f32.mrb[0].mxu0
        %1929 = vmatprep.mubr.f32.mxu0 0.0
        %1930 = vmatmul.mubr.f32.gmra.mrb[0].mxu0 %v1852
        %v1931 = vpop.f32.mrb[0].mxu0
        %v1932 = vadd.f32 0.0, %v1931
        %v1933 = vpop.f32.mrb[0].mxu0
        %1934 = vmatprep.mubr.f32.mxu0 0.0
        %1935 = vmatmul.mubr.f32.gmra.mrb[0].mxu0 %v1855
        %v1936 = vpop.f32.mrb[0].mxu0
        %v1937 = vadd.f32 0.0, %v1936
        %v1938 = vpop.f32.mrb[0].mxu0
        %1939 = vmatprep.mubr.f32.mxu0 0.0
        %1940 = vmatmul.mubr.f32.gmra.mrb[0].mxu0 %v1858
        %v1941 = vpop.f32.mrb[0].mxu0
        %v1942 = vadd.f32 0.0, %v1941
        %v1943 = vpop.f32.mrb[0].mxu0
        %1944 = vdwg.mxu0
        %v1945 = vadd.f32 %v1822, %v1927
        %v1946 = vadd.f32 %v1827, %v1932
        %v1947 = vadd.f32 %v1832, %v1937
        %v1948 = vadd.f32 %v1837, %v1942
        %v1949 = vld [vmem:[%s12] sm:$0x1]
        %v1951 = vlaneseq
        %v1952 = vshrl.u32 %v1951, 7
        %v1953 = vsub.s32 0, %v1952
        %v1954 = vrot.slane %v1949, %v1953
        %v1956 = vadd.f32 %v1945, %v1954
        %v1957 = vadd.f32 %v1946, %v1954
        %v1958 = vadd.f32 %v1947, %v1954
        %v1959 = vadd.f32 %v1948, %v1954
        %v1960 = vtanh.pop %v1956
        %v1961 = vtanh.pop %v1957
        %v1962 = vtanh.pop %v1958
        %v1963 = vtanh.pop %v1959
        %v1964 = vsub.f32 1.0, %v1655
        %v1965 = vsub.f32 1.0, %v1657
        %v1966 = vsub.f32 1.0, %v1659
        %v1967 = vsub.f32 1.0, %v1661
        %1968 = vrot.lane.b32.xlu0 %v1315, 32
        %v1969 = vpop.permute.xlu0 %1968
        %1970 = vrot.lane.b32.xlu0 %v1316, 32
        %v1971 = vpop.permute.xlu0 %1970
        %1972 = vrot.lane.b32.xlu0 %v1317, 32
        %v1973 = vpop.permute.xlu0 %1972
        %1974 = vrot.lane.b32.xlu0 %v1318, 32
        %v1975 = vpop.permute.xlu0 %1974
        %v1980 = vmul.f32 %v1964, %v1969
        %v1981 = vmul.f32 %v1965, %v1971
        %v1982 = vmul.f32 %v1966, %v1973
        %v1983 = vmul.f32 %v1967, %v1975
        %1988 = vrot.lane.b32.xlu0 %v1960, 32
        %v1989 = vpop.permute.xlu0 %1988
        %1990 = vrot.lane.b32.xlu0 %v1961, 32
        %v1991 = vpop.permute.xlu0 %1990
        %1992 = vrot.lane.b32.xlu0 %v1962, 32
        %v1993 = vpop.permute.xlu0 %1992
        %1994 = vrot.lane.b32.xlu0 %v1963, 32
        %v1995 = vpop.permute.xlu0 %1994
        %v2000 = vmul.f32 %v1655, %v1989
        %v2001 = vmul.f32 %v1657, %v1991
        %v2002 = vmul.f32 %v1659, %v1993
        %v2003 = vmul.f32 %v1661, %v1995
        %v2004 = vadd.f32 %v1980, %v2000
        %v2005 = vadd.f32 %v1981, %v2001
        %v2006 = vadd.f32 %v1982, %v2002
        %v2007 = vadd.f32 %v1983, %v2003
        %2012 = vrot.lane.b32.xlu0 %v2004, 96
        %v2013 = vpop.permute.xlu0 %2012
        %2014 = vrot.lane.b32.xlu0 %v2005, 96
        %v2015 = vpop.permute.xlu0 %2014
        %2016 = vrot.lane.b32.xlu0 %v2006, 96
        %v2017 = vpop.permute.xlu0 %2016
        %2018 = vrot.lane.b32.xlu0 %v2007, 96
        %v2019 = vpop.permute.xlu0 %2018
        %2024 = vst.msk [vmem:[%s687] sm:$0xff] %vm1327, %v2013
        %2025 = vst.msk [vmem:[%s687 + $0x8] sm:$0xff] %vm1327, %v2015
        %2026 = vst.msk [vmem:[%s687 + $0x10] sm:$0xff] %vm1327, %v2017
        %2027 = vst.msk [vmem:[%s687 + $0x18] sm:$0xff] %vm1327, %v2019
        %s2028 = sand.u32 %s345, 1
        %s2029 = scalar_lea.sflag [#allocation4], %s2028
        %s2030 = sand.u32 %s345, 1
        %s2031 = smul.addr %s2030, 32
        %s2032 = scalar_lea.vmem [#allocation19], %s2031
        // Predicated region
        $region113: #{tpu_custom_call.1} parent=71 // pred_check
          %p2033 = pneg %p355
        $region114: #{tpu_custom_call.1} parent=71 // pred_check_branch
          %2035 = sbr.rel (%p2033) target = $region116
        $region115: #{tpu_custom_call.1} parent=71 // pred_region
          %s2036 = smul.u32 4, %s39
          %s2038 = ssub.s32 512, 512
          %2039 = vsyncadd %s2029, %s2038
          %s2040 = smul.addr %s2036, 128
          %s2041 = scalar_lea.hbm %s13, %s2040
          %s2042 = sshll.u32 %s2032, 4
          %s2043 = int_to_ptr.vmem [resolvable:$true] %s2042
          %2048 = dma.vmem_to_hbm [thread:$0]  %s2043, 512, %s2041, %s2029, 128, 128, 8
        $region116: #{tpu_custom_call.1} parent=71 // pred_fallthru
          _
      $region72: #{tpu_custom_call.1} parent=5 // pred_fallthru
        _
      %p2049 = scmp.le.s32.totalorder 2, %s34
      // Predicated region
      $region117: #{tpu_custom_call.1} parent=5 // pred_check
        %p2050 = pneg %p2049
      $region118: #{tpu_custom_call.1} parent=5 // pred_check_branch
        %2052 = sbr.rel (%p2050) target = $region120
      $region119: #{tpu_custom_call.1} parent=5 // pred_region
        %s2053 = ssub.s32 %s34, 2
        // Predicated region
        $region121: #{tpu_custom_call.1} parent=119 // pred_check
          %p2054 = pneg %p361
        $region122: #{tpu_custom_call.1} parent=119 // pred_check_branch
          %2056 = sbr.rel (%p2054) target = $region124
        $region123: #{tpu_custom_call.1} parent=119 // pred_region
          %s2057 = sand.u32 %s346, 1
          %s2058 = scalar_lea.sflag [#allocation4], %s2057
          %s2059 = sand.u32 %s346, 1
          %s2060 = smul.addr %s2059, 32
          %s2061 = scalar_lea.vmem [#allocation19], %s2060
          %2062 = dma.done %s2058, 512
        $region124: #{tpu_custom_call.1} parent=119 // pred_fallthru
          _
      $region120: #{tpu_custom_call.1} parent=5 // pred_fallthru
        _
    $region6: #{tpu_custom_call.1} parent=1 // loop_footer
      %s38 = sadd.s32 1, %s34
    $region7: #{tpu_custom_call.1} parent=1 // loop_footer_branch
      %33 = sbr.rel target = $region3
    $region8: #{tpu_custom_call.1} parent=1 // loop_exit
      _
    %2063 = vsyncpa [#allocation3], 1
    %s2064 = scalar_lea.sflag [#allocation3], 1
    %2065 = vsyncpa %s2064, 1
    %2066 = vsyncpa [#allocation6], 1
    %s2067 = scalar_lea.sflag [#allocation6], 1
    %2068 = vsyncpa %s2067, 1
    %2069 = vsyncpa [#allocation9], 1
    %s2070 = scalar_lea.sflag [#allocation9], 1
    %2071 = vsyncpa %s2070, 1
    %2072 = vsyncpa [#allocation12], 1
    %2073 = vsyncpa [#allocation15], 1
    %2074 = vsyncpa [#allocation18], 1
    %2075 = vsyncpa [#allocation4], 1
    %s2076 = scalar_lea.sflag [#allocation4], 1
    %2077 = vsyncpa %s2076, 1

</llo_original>
